<compile_context>
chip_gen: v6e
topology: v6e:2x2x1
jax: 0.10.0
libtpu: 0.0.40
codegen_flags: <defaults>
</compile_context>

<pallas_src>
import functools

import jax
import jax.numpy as jnp
from jax.experimental import pallas as pl
from jax.experimental.pallas import tpu as pltpu

LANE = 128  # lane-dense padding width for channels / features / classes


def _pad_last(x, n):
    pad = n - x.shape[-1]
    if pad <= 0:
        return x
    return jnp.pad(x, [(0, 0)] * (x.ndim - 1) + [(0, pad)])


def _pad_2d(x, rows, cols):
    """Zero-pad a 2-D array to (rows, cols)."""
    out = jnp.zeros((rows, cols), x.dtype)
    return out.at[: x.shape[0], : x.shape[1]].set(x)


# ---------------------------------------------------------------------------
# Fully fused forward kernel (one grid step per batch element):
#   spatial : conv3x3(same) as ONE im2col matmul + bias + ReLU + global avg pool
#   temporal: Linear+ReLU stack, softmax-over-T attention, context vector
#   decoder : [sp | ctx] @ W_dec + b_dec   (weight pre-split, no lane concat)
# ---------------------------------------------------------------------------
def _dstfnet_fused_kernel(*refs, layer_num, T):
    (x2col_ref, wconv_ref, bconv_ref, xt_ref, wa_ref,
     dwsp_ref, dwtm_ref, db_ref) = refs[:8]
    layer_refs = refs[8:8 + 2 * layer_num]
    logits_ref, attn_ref = refs[8 + 2 * layer_num:]

    # ---- spatial encoder: single (HW, 128) @ (128, 128) MXU matmul
    conv = jnp.dot(x2col_ref[0], wconv_ref[...],
                   preferred_element_type=jnp.float32)          # (HW, 128) f32
    feat = jnp.maximum(conv + bconv_ref[...], 0.0)              # bias + ReLU
    sp = jnp.mean(feat, axis=0, keepdims=True)                  # GAP -> (1, 128)

    # ---- temporal encoder: Linear + ReLU stack, all (T, 128) lane-dense
    h = xt_ref[0]                                               # (T, 128) bf16
    for l in range(layer_num):
        w = layer_refs[2 * l][...]                              # (128, 128) bf16
        b = layer_refs[2 * l + 1][...]                          # (1, 128)   f32
        z = jnp.dot(h.astype(jnp.bfloat16), w,
                    preferred_element_type=jnp.float32)
        h = jnp.maximum(z + b, 0.0)                             # (T, 128) f32
    hf = h.astype(jnp.float32)

    # ---- temporal attention: scores as a lane-dense (1, T) row via MXU
    scores = jax.lax.dot_general(
        wa_ref[...], hf, (((1,), (1,)), ((), ())),
        preferred_element_type=jnp.float32)                     # (1, T)
    scores = scores - jnp.max(scores, axis=-1, keepdims=True)
    e = jnp.exp(scores)
    attn = e / jnp.sum(e, axis=-1, keepdims=True)               # (1, T)
    ctx = jnp.dot(attn, hf, preferred_element_type=jnp.float32)  # (1, 128)

    # ---- decoder (tiny f32 matmuls; keeps precision of the pooled features)
    logits = (jnp.dot(sp, dwsp_ref[...], preferred_element_type=jnp.float32)
              + jnp.dot(ctx, dwtm_ref[...], preferred_element_type=jnp.float32)
              + db_ref[...])                                    # (1, 128)
    logits_ref[0] = logits
    attn_ref[0] = attn                                          # lane-dense row


# ---------------------------------------------------------------------------
# Top-level forward (mode == 'dual' dataflow), one jit / one pallas_call.
# ---------------------------------------------------------------------------
@functools.partial(jax.jit, static_argnames=("layer_num",))
def dstfnet_forward(spatial_data, temporal_data, params, layer_num):
    """Returns {'pred': (B, num_classes), 'tattn': (B, T)}."""
    B, C, H, W = spatial_data.shape
    _, T, F = temporal_data.shape
    sp_ch = params["conv_w"].shape[0]
    hidden = params["te_w0"].shape[1]
    num_classes = params["dec_w"].shape[1]
    assert 9 * C <= LANE and F <= LANE and hidden <= LANE
    assert sp_ch <= LANE and num_classes <= LANE
    # TODO(synk): for 9*C / hidden > 128, tile the contraction dim instead.

    # ---- host-side prep (fused into this jit): NCHW->NHWC, halo pad, im2col
    x_nhwc = jnp.transpose(spatial_data, (0, 2, 3, 1)).astype(jnp.float32)
    xp = jnp.pad(x_nhwc, ((0, 0), (1, 1), (1, 1), (0, 0)))
    cols = [xp[:, dy:dy + H, dx:dx + W, :]
            for dy in range(3) for dx in range(3)]
    x2col = jnp.concatenate(cols, axis=-1).reshape(B, H * W, 9 * C)
    x2col = _pad_last(x2col, LANE).astype(jnp.bfloat16)          # (B, HW, 128)

    # conv weight (out, C, 3, 3) -> (3, 3, C, out) -> (9C, out) -> (128, 128)
    wconv = jnp.transpose(params["conv_w"], (2, 3, 1, 0)).reshape(9 * C, sp_ch)
    wconv = _pad_2d(wconv, LANE, LANE).astype(jnp.bfloat16)
    bconv = _pad_last(params["conv_b"].reshape(1, sp_ch), LANE).astype(jnp.float32)

    # temporal input + per-layer weights zero-padded to full lane width
    xt = _pad_last(temporal_data, LANE).astype(jnp.bfloat16)     # (B, T, 128)
    layer_inputs, layer_specs = [], []
    for l in range(layer_num):
        w = _pad_2d(params[f"te_w{l}"], LANE, LANE).astype(jnp.bfloat16)
        b = _pad_last(params[f"te_b{l}"].reshape(1, -1), LANE).astype(jnp.float32)
        layer_inputs += [w, b]
        layer_specs += [pl.BlockSpec((LANE, LANE), lambda i: (0, 0)),
                        pl.BlockSpec((1, LANE), lambda i: (0, 0))]

    wa = _pad_last(params["te_attn_w"].reshape(1, hidden),
                   LANE).astype(jnp.float32)

    # decoder weight pre-split (spatial rows / temporal rows), zero-padded
    dec_w = params["dec_w"].astype(jnp.float32)        # (sp_ch + hidden, ncls)
    dw_sp = _pad_2d(dec_w[:sp_ch], LANE, LANE)
    dw_tm = _pad_2d(dec_w[sp_ch:], LANE, LANE)
    db = _pad_last(params["dec_b"].reshape(1, num_classes),
                   LANE).astype(jnp.float32)

    logits, attn = pl.pallas_call(
        functools.partial(_dstfnet_fused_kernel, layer_num=layer_num, T=T),
        out_shape=(jax.ShapeDtypeStruct((B, 1, LANE), jnp.float32),
                   jax.ShapeDtypeStruct((B, 1, T), jnp.float32)),
        grid=(B,),
        in_specs=[
            pl.BlockSpec((1, H * W, LANE), lambda b: (b, 0, 0)),   # im2col
            pl.BlockSpec((LANE, LANE), lambda b: (0, 0)),          # conv W
            pl.BlockSpec((1, LANE), lambda b: (0, 0)),             # conv b
            pl.BlockSpec((1, T, LANE), lambda b: (b, 0, 0)),       # temporal x
            pl.BlockSpec((1, LANE), lambda b: (0, 0)),             # attn w
            pl.BlockSpec((LANE, LANE), lambda b: (0, 0)),          # dec W (sp)
            pl.BlockSpec((LANE, LANE), lambda b: (0, 0)),          # dec W (tm)
            pl.BlockSpec((1, LANE), lambda b: (0, 0)),             # dec b
        ] + layer_specs,
        out_specs=(pl.BlockSpec((1, 1, LANE), lambda b: (b, 0, 0)),
                   pl.BlockSpec((1, 1, T), lambda b: (b, 0, 0))),
        compiler_params=pltpu.CompilerParams(
            dimension_semantics=("parallel",)),
    )(x2col, wconv, bconv, xt, wa, dw_sp, dw_tm, db, *layer_inputs)

    pred = logits.reshape(B, LANE)[:, :num_classes]
    tattn = attn.reshape(B, T)
    return {"pred": pred, "tattn": tattn}


# ---------------------------------------------------------------------------
# Deterministic parameter init + pure-JAX reference + driver
# ---------------------------------------------------------------------------
def init_params(key, in_channels, in_features, hidden, layer_num, num_classes):
    ks = jax.random.split(key, 4 + 2 * layer_num)
    params = {}
    params["conv_w"] = 0.05 * jax.random.normal(
        ks[0], (64, in_channels, 3, 3), jnp.float32)
    params["conv_b"] = jnp.zeros((64,), jnp.float32)
    fin = in_features
    for l in range(layer_num):
        params[f"te_w{l}"] = 0.05 * jax.random.normal(
            ks[1 + l], (fin, hidden), jnp.float32)
        params[f"te_b{l}"] = jnp.zeros((hidden,), jnp.float32)
        fin = hidden
    params["te_attn_w"] = 0.05 * jax.random.normal(
        ks[1 + layer_num], (hidden,), jnp.float32)
    params["dec_w"] = 0.05 * jax.random.normal(
        ks[2 + layer_num], (64 + hidden, num_classes), jnp.float32)
    params["dec_b"] = jnp.zeros((num_classes,), jnp.float32)
    return params


def _reference_forward(spatial_data, temporal_data, params, layer_num):
    """Pure f32 JAX reference of the same (placeholder) module math."""
    B, C, H, W = spatial_data.shape
    x_nhwc = jnp.transpose(spatial_data, (0, 2, 3, 1))
    xp = jnp.pad(x_nhwc, ((0, 0), (1, 1), (1, 1), (0, 0)))
    cols = [xp[:, dy:dy + H, dx:dx + W, :]
            for dy in range(3) for dx in range(3)]
    x2 = jnp.concatenate(cols, axis=-1).reshape(B, H * W, 9 * C)
    wf = jnp.transpose(params["conv_w"], (2, 3, 1, 0)).reshape(9 * C, -1)
    feat = jnp.maximum(jnp.einsum("bpk,ko->bpo", x2, wf) + params["conv_b"], 0.0)
    sp = jnp.mean(feat, axis=1)

    h = temporal_data
    for l in range(layer_num):
        h = jnp.maximum(h @ params[f"te_w{l}"] + params[f"te_b{l}"], 0.0)
    scores = jnp.einsum("btd,d->bt", h, params["te_attn_w"])
    attn = jax.nn.softmax(scores, axis=-1)
    ctx = jnp.einsum("bt,btd->bd", attn, h)
    pred = jnp.concatenate([sp, ctx], axis=-1) @ params["dec_w"] + params["dec_b"]
    return pred, attn


if __name__ == "__main__":
    B, C, H, W = 2, 4, 16, 16       # spatial input (NCHW, PyTorch convention)
    T, F = 8, 16                    # temporal input (B, T, in_features)
    hidden = 32
    num_classes = 5
    layer_num = 2

    key = jax.random.PRNGKey(0)
    k_sp, k_tm, k_par = jax.random.split(key, 3)

    spatial_data = jax.random.normal(k_sp, (B, C, H, W), jnp.float32)
    temporal_data = jax.random.normal(k_tm, (B, T, F), jnp.float32)
    params = init_params(k_par, C, F, hidden, layer_num, num_classes)

    out = dstfnet_forward(spatial_data, temporal_data, params,
                          layer_num=layer_num)
    jax.block_until_ready(out)

    assert out["pred"].shape == (B, num_classes)
    assert out["tattn"].shape == (B, T)

    ref_pred, ref_attn = _reference_forward(spatial_data, temporal_data,
                                            params, layer_num)
    assert jnp.allclose(out["pred"], ref_pred, atol=3e-2), (
        "pred max err", float(jnp.max(jnp.abs(out["pred"] - ref_pred))))
    assert jnp.allclose(out["tattn"], ref_attn, atol=1e-2), (
        "tattn max err", float(jnp.max(jnp.abs(out["tattn"] - ref_attn))))
    print("KERNEL_OK")
</pallas_src>

<mosaic_0001>
module attributes {stable_mosaic.version = 11 : i64} {
  func.func @_dstfnet_fused_kernel(%arg0: i32, %arg1: memref<1x256x128xbf16, #tpu.memory_space<vmem>>, %arg2: memref<128x128xbf16, #tpu.memory_space<vmem>>, %arg3: memref<1x128xf32, #tpu.memory_space<vmem>>, %arg4: memref<1x8x128xbf16, #tpu.memory_space<vmem>>, %arg5: memref<1x128xf32, #tpu.memory_space<vmem>>, %arg6: memref<128x128xf32, #tpu.memory_space<vmem>>, %arg7: memref<128x128xf32, #tpu.memory_space<vmem>>, %arg8: memref<1x128xf32, #tpu.memory_space<vmem>>, %arg9: memref<128x128xbf16, #tpu.memory_space<vmem>>, %arg10: memref<1x128xf32, #tpu.memory_space<vmem>>, %arg11: memref<128x128xbf16, #tpu.memory_space<vmem>>, %arg12: memref<1x128xf32, #tpu.memory_space<vmem>>, %arg13: memref<1x1x128xf32, #tpu.memory_space<vmem>>, %arg14: memref<1x1x8xf32, #tpu.memory_space<vmem>>) attributes {dimension_semantics = [#tpu.dimension_semantics<parallel>], iteration_bounds = array<i64: 2>, scalar_prefetch = 0 : i64, scratch_operands = 0 : i64, tpu.core_type = #tpu.core_type<tc>, window_params = [{transform_indices = @transform_0, window_bounds = array<i64: 1, 256, 128>}, {pipeline_mode = #tpu.pipeline_mode<synchronous>, transform_indices = @transform_1, window_bounds = array<i64: 128, 128>}, {pipeline_mode = #tpu.pipeline_mode<synchronous>, transform_indices = @transform_2, window_bounds = array<i64: 1, 128>}, {transform_indices = @transform_3, window_bounds = array<i64: 1, 8, 128>}, {pipeline_mode = #tpu.pipeline_mode<synchronous>, transform_indices = @transform_4, window_bounds = array<i64: 1, 128>}, {pipeline_mode = #tpu.pipeline_mode<synchronous>, transform_indices = @transform_5, window_bounds = array<i64: 128, 128>}, {pipeline_mode = #tpu.pipeline_mode<synchronous>, transform_indices = @transform_6, window_bounds = array<i64: 128, 128>}, {pipeline_mode = #tpu.pipeline_mode<synchronous>, transform_indices = @transform_7, window_bounds = array<i64: 1, 128>}, {pipeline_mode = #tpu.pipeline_mode<synchronous>, transform_indices = @transform_8, window_bounds = array<i64: 128, 128>}, {pipeline_mode = #tpu.pipeline_mode<synchronous>, transform_indices = @transform_9, window_bounds = array<i64: 1, 128>}, {pipeline_mode = #tpu.pipeline_mode<synchronous>, transform_indices = @transform_10, window_bounds = array<i64: 128, 128>}, {pipeline_mode = #tpu.pipeline_mode<synchronous>, transform_indices = @transform_11, window_bounds = array<i64: 1, 128>}, {transform_indices = @transform_12, window_bounds = array<i64: 1, 1, 128>}, {transform_indices = @transform_13, window_bounds = array<i64: 1, 1, 8>}]} {
    %c0 = arith.constant 0 : index
    %c0_0 = arith.constant 0 : index
    %c0_1 = arith.constant 0 : index
    %0 = vector.load %arg1[%c0, %c0_0, %c0_1] : memref<1x256x128xbf16, #tpu.memory_space<vmem>>, vector<1x256x128xbf16>
    %1 = vector.shape_cast %0 : vector<1x256x128xbf16> to vector<256x128xbf16>
    %c0_2 = arith.constant 0 : index
    %c0_3 = arith.constant 0 : index
    %2 = vector.load %arg2[%c0_2, %c0_3] : memref<128x128xbf16, #tpu.memory_space<vmem>>, vector<128x128xbf16>
    %cst = arith.constant dense<0.000000e+00> : vector<256x128xf32>
    %3 = tpu.matmul %1, %2, %cst {dimension_numbers = #tpu.dot_dimension_numbers<[1], [0], [0], [1], [0, 0, 1, 1], [], []>} : vector<256x128xbf16>, vector<128x128xbf16>, vector<256x128xf32> -> vector<256x128xf32>
    %c0_4 = arith.constant 0 : index
    %c0_5 = arith.constant 0 : index
    %4 = vector.load %arg3[%c0_4, %c0_5] : memref<1x128xf32, #tpu.memory_space<vmem>>, vector<1x128xf32>
    %5 = vector.broadcast %4 : vector<1x128xf32> to vector<256x128xf32>
    %6 = arith.addf %3, %5 : vector<256x128xf32>
    %cst_6 = arith.constant 0.000000e+00 : f32
    %7 = vector.broadcast %cst_6 : f32 to vector<256x128xf32>
    %8 = arith.maximumf %6, %7 : vector<256x128xf32>
    %cst_7 = arith.constant dense<0.000000e+00> : vector<128xf32>
    %9 = vector.multi_reduction <add>, %8, %cst_7 [0] : vector<256x128xf32> to vector<128xf32>
    %10 = vector.shape_cast %9 : vector<128xf32> to vector<1x128xf32>
    %cst_8 = arith.constant 2.560000e+02 : f32
    %11 = vector.broadcast %cst_8 : f32 to vector<1x128xf32>
    %12 = arith.divf %10, %11 : vector<1x128xf32>
    %c0_9 = arith.constant 0 : index
    %c0_10 = arith.constant 0 : index
    %c0_11 = arith.constant 0 : index
    %13 = vector.load %arg4[%c0_9, %c0_10, %c0_11] : memref<1x8x128xbf16, #tpu.memory_space<vmem>>, vector<1x8x128xbf16>
    %14 = vector.shape_cast %13 : vector<1x8x128xbf16> to vector<8x128xbf16>
    %c0_12 = arith.constant 0 : index
    %c0_13 = arith.constant 0 : index
    %15 = vector.load %arg9[%c0_12, %c0_13] : memref<128x128xbf16, #tpu.memory_space<vmem>>, vector<128x128xbf16>
    %c0_14 = arith.constant 0 : index
    %c0_15 = arith.constant 0 : index
    %16 = vector.load %arg10[%c0_14, %c0_15] : memref<1x128xf32, #tpu.memory_space<vmem>>, vector<1x128xf32>
    %cst_16 = arith.constant dense<0.000000e+00> : vector<8x128xf32>
    %17 = tpu.matmul %14, %15, %cst_16 {dimension_numbers = #tpu.dot_dimension_numbers<[1], [0], [0], [1], [0, 0, 1, 1], [], []>} : vector<8x128xbf16>, vector<128x128xbf16>, vector<8x128xf32> -> vector<8x128xf32>
    %18 = vector.broadcast %16 : vector<1x128xf32> to vector<8x128xf32>
    %19 = arith.addf %17, %18 : vector<8x128xf32>
    %cst_17 = arith.constant 0.000000e+00 : f32
    %20 = vector.broadcast %cst_17 : f32 to vector<8x128xf32>
    %21 = arith.maximumf %19, %20 : vector<8x128xf32>
    %c0_18 = arith.constant 0 : index
    %c0_19 = arith.constant 0 : index
    %22 = vector.load %arg11[%c0_18, %c0_19] : memref<128x128xbf16, #tpu.memory_space<vmem>>, vector<128x128xbf16>
    %c0_20 = arith.constant 0 : index
    %c0_21 = arith.constant 0 : index
    %23 = vector.load %arg12[%c0_20, %c0_21] : memref<1x128xf32, #tpu.memory_space<vmem>>, vector<1x128xf32>
    %24 = arith.truncf %21 : vector<8x128xf32> to vector<8x128xbf16>
    %cst_22 = arith.constant dense<0.000000e+00> : vector<8x128xf32>
    %25 = tpu.matmul %24, %22, %cst_22 {dimension_numbers = #tpu.dot_dimension_numbers<[1], [0], [0], [1], [0, 0, 1, 1], [], []>} : vector<8x128xbf16>, vector<128x128xbf16>, vector<8x128xf32> -> vector<8x128xf32>
    %26 = vector.broadcast %23 : vector<1x128xf32> to vector<8x128xf32>
    %27 = arith.addf %25, %26 : vector<8x128xf32>
    %cst_23 = arith.constant 0.000000e+00 : f32
    %28 = vector.broadcast %cst_23 : f32 to vector<8x128xf32>
    %29 = arith.maximumf %27, %28 : vector<8x128xf32>
    %c0_24 = arith.constant 0 : index
    %c0_25 = arith.constant 0 : index
    %30 = vector.load %arg5[%c0_24, %c0_25] : memref<1x128xf32, #tpu.memory_space<vmem>>, vector<1x128xf32>
    %cst_26 = arith.constant dense<0.000000e+00> : vector<1x8xf32>
    %31 = tpu.matmul %30, %29, %cst_26 {dimension_numbers = #tpu.dot_dimension_numbers<[1], [1], [0], [0], [0, 0, 1, 0], [], []>} : vector<1x128xf32>, vector<8x128xf32>, vector<1x8xf32> -> vector<1x8xf32>
    %cst_27 = arith.constant dense<0xFF800000> : vector<1xf32>
    %32 = vector.multi_reduction <maximumf>, %31, %cst_27 [1] : vector<1x8xf32> to vector<1xf32>
    %33 = vector.shape_cast %32 : vector<1xf32> to vector<1x1xf32>
    %34 = vector.broadcast %33 : vector<1x1xf32> to vector<1x8xf32>
    %35 = arith.subf %31, %34 : vector<1x8xf32>
    %36 = math.exp %35 : vector<1x8xf32>
    %cst_28 = arith.constant dense<0.000000e+00> : vector<1xf32>
    %37 = vector.multi_reduction <add>, %36, %cst_28 [1] : vector<1x8xf32> to vector<1xf32>
    %38 = vector.shape_cast %37 : vector<1xf32> to vector<1x1xf32>
    %39 = vector.broadcast %38 : vector<1x1xf32> to vector<1x8xf32>
    %40 = arith.divf %36, %39 : vector<1x8xf32>
    %cst_29 = arith.constant dense<0.000000e+00> : vector<1x128xf32>
    %41 = tpu.matmul %40, %29, %cst_29 {dimension_numbers = #tpu.dot_dimension_numbers<[1], [0], [0], [1], [0, 0, 1, 1], [], []>} : vector<1x8xf32>, vector<8x128xf32>, vector<1x128xf32> -> vector<1x128xf32>
    %c0_30 = arith.constant 0 : index
    %c0_31 = arith.constant 0 : index
    %42 = vector.load %arg6[%c0_30, %c0_31] : memref<128x128xf32, #tpu.memory_space<vmem>>, vector<128x128xf32>
    %cst_32 = arith.constant dense<0.000000e+00> : vector<1x128xf32>
    %43 = tpu.matmul %12, %42, %cst_32 {dimension_numbers = #tpu.dot_dimension_numbers<[1], [0], [0], [1], [0, 0, 1, 1], [], []>} : vector<1x128xf32>, vector<128x128xf32>, vector<1x128xf32> -> vector<1x128xf32>
    %c0_33 = arith.constant 0 : index
    %c0_34 = arith.constant 0 : index
    %44 = vector.load %arg7[%c0_33, %c0_34] : memref<128x128xf32, #tpu.memory_space<vmem>>, vector<128x128xf32>
    %cst_35 = arith.constant dense<0.000000e+00> : vector<1x128xf32>
    %45 = tpu.matmul %41, %44, %cst_35 {dimension_numbers = #tpu.dot_dimension_numbers<[1], [0], [0], [1], [0, 0, 1, 1], [], []>} : vector<1x128xf32>, vector<128x128xf32>, vector<1x128xf32> -> vector<1x128xf32>
    %46 = arith.addf %43, %45 : vector<1x128xf32>
    %c0_36 = arith.constant 0 : index
    %c0_37 = arith.constant 0 : index
    %47 = vector.load %arg8[%c0_36, %c0_37] : memref<1x128xf32, #tpu.memory_space<vmem>>, vector<1x128xf32>
    %48 = arith.addf %46, %47 : vector<1x128xf32>
    %c0_38 = arith.constant 0 : index
    %c0_39 = arith.constant 0 : index
    %c0_40 = arith.constant 0 : index
    %49 = vector.load %arg13[%c0_38, %c0_39, %c0_40] : memref<1x1x128xf32, #tpu.memory_space<vmem>>, vector<1x1x128xf32>
    %50 = vector.shape_cast %49 : vector<1x1x128xf32> to vector<1x128xf32>
    %51 = vector.shape_cast %48 : vector<1x128xf32> to vector<1x1x128xf32>
    tpu.vector_store %arg13[%c0_38, %c0_39, %c0_40], %51 {strides = array<i32>} : memref<1x1x128xf32, #tpu.memory_space<vmem>>, vector<1x1x128xf32>,
    %c0_41 = arith.constant 0 : index
    %c0_42 = arith.constant 0 : index
    %c0_43 = arith.constant 0 : index
    %52 = vector.load %arg14[%c0_41, %c0_42, %c0_43] : memref<1x1x8xf32, #tpu.memory_space<vmem>>, vector<1x1x8xf32>
    %53 = vector.shape_cast %52 : vector<1x1x8xf32> to vector<1x8xf32>
    %54 = vector.shape_cast %40 : vector<1x8xf32> to vector<1x1x8xf32>
    tpu.vector_store %arg14[%c0_41, %c0_42, %c0_43], %54 {strides = array<i32>} : memref<1x1x8xf32, #tpu.memory_space<vmem>>, vector<1x1x8xf32>,
    return
  }
  func.func @transform_0(%arg0: i32) -> (i32, i32, i32) {
    %c0_i32 = arith.constant 0 : i32
    %c0_i32_0 = arith.constant 0 : i32
    %c0_i32_1 = arith.constant 0 : i32
    return %arg0, %c0_i32, %c0_i32_0 : i32, i32, i32
  }
  func.func @transform_1(%arg0: i32) -> (i32, i32) {
    %c0_i32 = arith.constant 0 : i32
    %c0_i32_0 = arith.constant 0 : i32
    %c0_i32_1 = arith.constant 0 : i32
    return %c0_i32, %c0_i32_0 : i32, i32
  }
  func.func @transform_2(%arg0: i32) -> (i32, i32) {
    %c0_i32 = arith.constant 0 : i32
    %c0_i32_0 = arith.constant 0 : i32
    %c0_i32_1 = arith.constant 0 : i32
    return %c0_i32, %c0_i32_0 : i32, i32
  }
  func.func @transform_3(%arg0: i32) -> (i32, i32, i32) {
    %c0_i32 = arith.constant 0 : i32
    %c0_i32_0 = arith.constant 0 : i32
    %c0_i32_1 = arith.constant 0 : i32
    return %arg0, %c0_i32, %c0_i32_0 : i32, i32, i32
  }
  func.func @transform_4(%arg0: i32) -> (i32, i32) {
    %c0_i32 = arith.constant 0 : i32
    %c0_i32_0 = arith.constant 0 : i32
    %c0_i32_1 = arith.constant 0 : i32
    return %c0_i32, %c0_i32_0 : i32, i32
  }
  func.func @transform_5(%arg0: i32) -> (i32, i32) {
    %c0_i32 = arith.constant 0 : i32
    %c0_i32_0 = arith.constant 0 : i32
    %c0_i32_1 = arith.constant 0 : i32
    return %c0_i32, %c0_i32_0 : i32, i32
  }
  func.func @transform_6(%arg0: i32) -> (i32, i32) {
    %c0_i32 = arith.constant 0 : i32
    %c0_i32_0 = arith.constant 0 : i32
    %c0_i32_1 = arith.constant 0 : i32
    return %c0_i32, %c0_i32_0 : i32, i32
  }
  func.func @transform_7(%arg0: i32) -> (i32, i32) {
    %c0_i32 = arith.constant 0 : i32
    %c0_i32_0 = arith.constant 0 : i32
    %c0_i32_1 = arith.constant 0 : i32
    return %c0_i32, %c0_i32_0 : i32, i32
  }
  func.func @transform_8(%arg0: i32) -> (i32, i32) {
    %c0_i32 = arith.constant 0 : i32
    %c0_i32_0 = arith.constant 0 : i32
    %c0_i32_1 = arith.constant 0 : i32
    return %c0_i32, %c0_i32_0 : i32, i32
  }
  func.func @transform_9(%arg0: i32) -> (i32, i32) {
    %c0_i32 = arith.constant 0 : i32
    %c0_i32_0 = arith.constant 0 : i32
    %c0_i32_1 = arith.constant 0 : i32
    return %c0_i32, %c0_i32_0 : i32, i32
  }
  func.func @transform_10(%arg0: i32) -> (i32, i32) {
    %c0_i32 = arith.constant 0 : i32
    %c0_i32_0 = arith.constant 0 : i32
    %c0_i32_1 = arith.constant 0 : i32
    return %c0_i32, %c0_i32_0 : i32, i32
  }
  func.func @transform_11(%arg0: i32) -> (i32, i32) {
    %c0_i32 = arith.constant 0 : i32
    %c0_i32_0 = arith.constant 0 : i32
    %c0_i32_1 = arith.constant 0 : i32
    return %c0_i32, %c0_i32_0 : i32, i32
  }
  func.func @transform_12(%arg0: i32) -> (i32, i32, i32) {
    %c0_i32 = arith.constant 0 : i32
    %c0_i32_0 = arith.constant 0 : i32
    %c0_i32_1 = arith.constant 0 : i32
    return %arg0, %c0_i32, %c0_i32_0 : i32, i32, i32
  }
  func.func @transform_13(%arg0: i32) -> (i32, i32, i32) {
    %c0_i32 = arith.constant 0 : i32
    %c0_i32_0 = arith.constant 0 : i32
    %c0_i32_1 = arith.constant 0 : i32
    return %arg0, %c0_i32, %c0_i32_0 : i32, i32, i32
  }
}

</mosaic_0001>

<llo_original>
// kernel: dstfnet_forward.1
$region0: #{dstfnet_forward.1}
  #allocation0 [shape = 'u32[]', space=smem, size = 0x4, offset = 0x4, fixed_abs, tag = 'smem constant byte address 0x4 - core index']
  #allocation1 [shape = 'u32[144,128]{1,0:T(1,128)}', space=vmem, size = 0x12000, scoped, tag = 'internal scratch']
  %s0 = inlined_call_operand.vmem [shape: bf16[2,256,128], index: 0, kind: input, shape index: {}]
  %s1 = inlined_call_operand.vmem [shape: bf16[128,128], index: 1, kind: input, shape index: {}]
  %s2 = inlined_call_operand.vmem [shape: f32[1,128], index: 2, kind: input, shape index: {}]
  %s3 = inlined_call_operand.vmem [shape: bf16[2,8,128], index: 3, kind: input, shape index: {}]
  %s4 = inlined_call_operand.vmem [shape: f32[1,128], index: 4, kind: input, shape index: {}]
  %s5 = inlined_call_operand.vmem [shape: f32[128,128], index: 5, kind: input, shape index: {}]
  %s6 = inlined_call_operand.vmem [shape: f32[128,128], index: 6, kind: input, shape index: {}]
  %s7 = inlined_call_operand.vmem [shape: f32[1,128], index: 7, kind: input, shape index: {}]
  %s8 = inlined_call_operand.vmem [shape: bf16[128,128], index: 8, kind: input, shape index: {}]
  %s9 = inlined_call_operand.vmem [shape: f32[1,128], index: 9, kind: input, shape index: {}]
  %s10 = inlined_call_operand.vmem [shape: bf16[128,128], index: 10, kind: input, shape index: {}]
  %s11 = inlined_call_operand.vmem [shape: f32[1,128], index: 11, kind: input, shape index: {}]
  %s12 = inlined_call_operand.hbm [shape: f32[2,1,128], index: 12, kind: output, shape index: {0}]
  %s13 = inlined_call_operand.hbm [shape: f32[2,1,8], index: 13, kind: output, shape index: {1}]
  %14 = xla_tuple %s12, %s13
  %s15 = sld [smem:[#allocation0]]
  $region89: #{dstfnet_forward.1} parent=0
    _
  %s17 = ssub.s32 1, %s15
  %s18 = scalar_select 0, %s17, %s15
  $region1: #{dstfnet_forward.1} parent=0
    #allocation2 [shape = 'u8[1024]{0}', space=vmem, size = 0x400, scoped, tag = 'output window, operand 0']
    #allocation3 [shape = 's32[2]{0}', space=sflag, size = 0x8, scoped, tag = 'scoped memory for dstfnet_forward.1']
    #allocation4 [shape = 'u8[1024]{0}', space=vmem, size = 0x400, scoped, tag = 'output window, operand 1']
    #allocation5 [shape = 's32[2]{0}', space=sflag, size = 0x8, scoped, tag = 'scoped memory for dstfnet_forward.1']
    %19 = vsyncpa [#allocation3], 0
    %s20 = scalar_lea.sflag [#allocation3], 1
    %21 = vsyncpa %s20, 0
    %22 = vsyncpa [#allocation5], 0
    %s23 = scalar_lea.sflag [#allocation5], 1
    %24 = vsyncpa %s23, 0
    loop: start=0, step=1, limit=4
    $region2: #{dstfnet_forward.1} parent=1 // loop_pre_header
      _
    $region3: #{dstfnet_forward.1} parent=1 // loop_header
      %s26 = sphi 0, %s30
      %p27 = scmp.ge.s32.totalorder %s26, 4
      %s36 = sphi 0, %s38
      %s39 = sphi 0, %s36
      %s40 = sphi 0, %s39
      %s56 = sphi 0, %s40
      %s60 = sphi 0, %s60
      %s62 = sphi 0, %s60
      %s63 = sphi 0, %s62
      %s77 = sphi 0, %s63
      %s81 = sphi 0, %s81
      %s83 = sphi 0, %s81
      %s84 = sphi 0, %s83
      %s98 = sphi 0, %s84
      %s104 = sphi 0, %s106
      %s107 = sphi 0, %s104
      %s108 = sphi 0, %s107
      %s124 = sphi 0, %s108
      %s128 = sphi 0, %s128
      %s130 = sphi 0, %s128
      %s131 = sphi 0, %s130
      %s145 = sphi 0, %s131
      %s149 = sphi 0, %s149
      %s151 = sphi 0, %s149
      %s152 = sphi 0, %s151
      %s166 = sphi 0, %s152
      %s170 = sphi 0, %s170
      %s172 = sphi 0, %s170
      %s173 = sphi 0, %s172
      %s187 = sphi 0, %s173
      %s191 = sphi 0, %s191
      %s193 = sphi 0, %s191
      %s194 = sphi 0, %s193
      %s208 = sphi 0, %s194
      %s212 = sphi 0, %s212
      %s214 = sphi 0, %s212
      %s215 = sphi 0, %s214
      %s229 = sphi 0, %s215
      %s233 = sphi 0, %s233
      %s235 = sphi 0, %s233
      %s236 = sphi 0, %s235
      %s250 = sphi 0, %s236
      %s254 = sphi 0, %s254
      %s256 = sphi 0, %s254
      %s257 = sphi 0, %s256
      %s271 = sphi 0, %s257
      %s275 = sphi 0, %s275
      %s277 = sphi 0, %s275
      %s278 = sphi 0, %s277
      %s292 = sphi 0, %s278
      %s298 = sphi 0, %s300
      %s301 = sphi 0, %s298
      %s302 = sphi 0, %s301
      %s318 = sphi 0, %s302
      %s324 = sphi 0, %s326
      %s327 = sphi 0, %s324
      %s328 = sphi 0, %s327
      %s344 = sphi 0, %s328
    $region4: #{dstfnet_forward.1} parent=1 // loop_header_branch
      %29 = sbr.rel (%p27) target = $region8
    $region5: #{dstfnet_forward.1} parent=1 // loop_body
      %s31 = ssub.s32 %s26, 1
      %s32 = ssub.s32 %s26, 2
      %s33 = sadd.s32 %s26, 1
      %s34 = ssub.s32 %s26, %s33
      %p35 = scmp.eq.s32.totalorder %s34, 0
      %s37 = sadd.s32 %s36, 1
      %s38 = scalar_select %p35, %s36, %s37
      %p41 = pneg %p35
      %p42 = scmp.eq.s32.totalorder %s26, 1
      %p43 = por %p41, %p42
      %p44 = scmp.ne.s32.totalorder %s36, %s39
      %p45 = scmp.eq.s32.totalorder %s26, 0
      %p46 = por %p44, %p45
      %p47 = scmp.ne.s32.totalorder %s36, %s39
      %p48 = scmp.eq.s32.totalorder %s31, 1
      %p49 = por %p47, %p48
      %p50 = scmp.ne.s32.totalorder %s39, %s40
      %p51 = scmp.eq.s32.totalorder %s31, 0
      %p52 = por %p50, %p51
      %p53 = scmp.ne.s32.totalorder %s39, %s40
      %p54 = scmp.eq.s32.totalorder %s32, 1
      %p55 = por %p53, %p54
      %p57 = scmp.ne.s32.totalorder %s40, %s56
      %p58 = scmp.eq.s32.totalorder %s32, 0
      %p59 = por %p57, %p58
      %s61 = sadd.s32 %s60, 1
      %p64 = scmp.eq.s32.totalorder %s26, 1
      %p65 = scmp.ne.s32.totalorder %s60, %s62
      %p66 = scmp.eq.s32.totalorder %s26, 0
      %p67 = por %p65, %p66
      %p68 = scmp.ne.s32.totalorder %s60, %s62
      %p69 = scmp.eq.s32.totalorder %s31, 1
      %p70 = por %p68, %p69
      %p71 = scmp.ne.s32.totalorder %s62, %s63
      %p72 = scmp.eq.s32.totalorder %s31, 0
      %p73 = por %p71, %p72
      %p74 = scmp.ne.s32.totalorder %s62, %s63
      %p75 = scmp.eq.s32.totalorder %s32, 1
      %p76 = por %p74, %p75
      %p78 = scmp.ne.s32.totalorder %s63, %s77
      %p79 = scmp.eq.s32.totalorder %s32, 0
      %p80 = por %p78, %p79
      %s82 = sadd.s32 %s81, 1
      %p85 = scmp.eq.s32.totalorder %s26, 1
      %p86 = scmp.ne.s32.totalorder %s81, %s83
      %p87 = scmp.eq.s32.totalorder %s26, 0
      %p88 = por %p86, %p87
      %p89 = scmp.ne.s32.totalorder %s81, %s83
      %p90 = scmp.eq.s32.totalorder %s31, 1
      %p91 = por %p89, %p90
      %p92 = scmp.ne.s32.totalorder %s83, %s84
      %p93 = scmp.eq.s32.totalorder %s31, 0
      %p94 = por %p92, %p93
      %p95 = scmp.ne.s32.totalorder %s83, %s84
      %p96 = scmp.eq.s32.totalorder %s32, 1
      %p97 = por %p95, %p96
      %p99 = scmp.ne.s32.totalorder %s84, %s98
      %p100 = scmp.eq.s32.totalorder %s32, 0
      %p101 = por %p99, %p100
      %s102 = ssub.s32 %s26, %s33
      %p103 = scmp.eq.s32.totalorder %s102, 0
      %s105 = sadd.s32 %s104, 1
      %s106 = scalar_select %p103, %s104, %s105
      %p109 = pneg %p103
      %p110 = scmp.eq.s32.totalorder %s26, 1
      %p111 = por %p109, %p110
      %p112 = scmp.ne.s32.totalorder %s104, %s107
      %p113 = scmp.eq.s32.totalorder %s26, 0
      %p114 = por %p112, %p113
      %p115 = scmp.ne.s32.totalorder %s104, %s107
      %p116 = scmp.eq.s32.totalorder %s31, 1
      %p117 = por %p115, %p116
      %p118 = scmp.ne.s32.totalorder %s107, %s108
      %p119 = scmp.eq.s32.totalorder %s31, 0
      %p120 = por %p118, %p119
      %p121 = scmp.ne.s32.totalorder %s107, %s108
      %p122 = scmp.eq.s32.totalorder %s32, 1
      %p123 = por %p121, %p122
      %p125 = scmp.ne.s32.totalorder %s108, %s124
      %p126 = scmp.eq.s32.totalorder %s32, 0
      %p127 = por %p125, %p126
      %s129 = sadd.s32 %s128, 1
      %p132 = scmp.eq.s32.totalorder %s26, 1
      %p133 = scmp.ne.s32.totalorder %s128, %s130
      %p134 = scmp.eq.s32.totalorder %s26, 0
      %p135 = por %p133, %p134
      %p136 = scmp.ne.s32.totalorder %s128, %s130
      %p137 = scmp.eq.s32.totalorder %s31, 1
      %p138 = por %p136, %p137
      %p139 = scmp.ne.s32.totalorder %s130, %s131
      %p140 = scmp.eq.s32.totalorder %s31, 0
      %p141 = por %p139, %p140
      %p142 = scmp.ne.s32.totalorder %s130, %s131
      %p143 = scmp.eq.s32.totalorder %s32, 1
      %p144 = por %p142, %p143
      %p146 = scmp.ne.s32.totalorder %s131, %s145
      %p147 = scmp.eq.s32.totalorder %s32, 0
      %p148 = por %p146, %p147
      %s150 = sadd.s32 %s149, 1
      %p153 = scmp.eq.s32.totalorder %s26, 1
      %p154 = scmp.ne.s32.totalorder %s149, %s151
      %p155 = scmp.eq.s32.totalorder %s26, 0
      %p156 = por %p154, %p155
      %p157 = scmp.ne.s32.totalorder %s149, %s151
      %p158 = scmp.eq.s32.totalorder %s31, 1
      %p159 = por %p157, %p158
      %p160 = scmp.ne.s32.totalorder %s151, %s152
      %p161 = scmp.eq.s32.totalorder %s31, 0
      %p162 = por %p160, %p161
      %p163 = scmp.ne.s32.totalorder %s151, %s152
      %p164 = scmp.eq.s32.totalorder %s32, 1
      %p165 = por %p163, %p164
      %p167 = scmp.ne.s32.totalorder %s152, %s166
      %p168 = scmp.eq.s32.totalorder %s32, 0
      %p169 = por %p167, %p168
      %s171 = sadd.s32 %s170, 1
      %p174 = scmp.eq.s32.totalorder %s26, 1
      %p175 = scmp.ne.s32.totalorder %s170, %s172
      %p176 = scmp.eq.s32.totalorder %s26, 0
      %p177 = por %p175, %p176
      %p178 = scmp.ne.s32.totalorder %s170, %s172
      %p179 = scmp.eq.s32.totalorder %s31, 1
      %p180 = por %p178, %p179
      %p181 = scmp.ne.s32.totalorder %s172, %s173
      %p182 = scmp.eq.s32.totalorder %s31, 0
      %p183 = por %p181, %p182
      %p184 = scmp.ne.s32.totalorder %s172, %s173
      %p185 = scmp.eq.s32.totalorder %s32, 1
      %p186 = por %p184, %p185
      %p188 = scmp.ne.s32.totalorder %s173, %s187
      %p189 = scmp.eq.s32.totalorder %s32, 0
      %p190 = por %p188, %p189
      %s192 = sadd.s32 %s191, 1
      %p195 = scmp.eq.s32.totalorder %s26, 1
      %p196 = scmp.ne.s32.totalorder %s191, %s193
      %p197 = scmp.eq.s32.totalorder %s26, 0
      %p198 = por %p196, %p197
      %p199 = scmp.ne.s32.totalorder %s191, %s193
      %p200 = scmp.eq.s32.totalorder %s31, 1
      %p201 = por %p199, %p200
      %p202 = scmp.ne.s32.totalorder %s193, %s194
      %p203 = scmp.eq.s32.totalorder %s31, 0
      %p204 = por %p202, %p203
      %p205 = scmp.ne.s32.totalorder %s193, %s194
      %p206 = scmp.eq.s32.totalorder %s32, 1
      %p207 = por %p205, %p206
      %p209 = scmp.ne.s32.totalorder %s194, %s208
      %p210 = scmp.eq.s32.totalorder %s32, 0
      %p211 = por %p209, %p210
      %s213 = sadd.s32 %s212, 1
      %p216 = scmp.eq.s32.totalorder %s26, 1
      %p217 = scmp.ne.s32.totalorder %s212, %s214
      %p218 = scmp.eq.s32.totalorder %s26, 0
      %p219 = por %p217, %p218
      %p220 = scmp.ne.s32.totalorder %s212, %s214
      %p221 = scmp.eq.s32.totalorder %s31, 1
      %p222 = por %p220, %p221
      %p223 = scmp.ne.s32.totalorder %s214, %s215
      %p224 = scmp.eq.s32.totalorder %s31, 0
      %p225 = por %p223, %p224
      %p226 = scmp.ne.s32.totalorder %s214, %s215
      %p227 = scmp.eq.s32.totalorder %s32, 1
      %p228 = por %p226, %p227
      %p230 = scmp.ne.s32.totalorder %s215, %s229
      %p231 = scmp.eq.s32.totalorder %s32, 0
      %p232 = por %p230, %p231
      %s234 = sadd.s32 %s233, 1
      %p237 = scmp.eq.s32.totalorder %s26, 1
      %p238 = scmp.ne.s32.totalorder %s233, %s235
      %p239 = scmp.eq.s32.totalorder %s26, 0
      %p240 = por %p238, %p239
      %p241 = scmp.ne.s32.totalorder %s233, %s235
      %p242 = scmp.eq.s32.totalorder %s31, 1
      %p243 = por %p241, %p242
      %p244 = scmp.ne.s32.totalorder %s235, %s236
      %p245 = scmp.eq.s32.totalorder %s31, 0
      %p246 = por %p244, %p245
      %p247 = scmp.ne.s32.totalorder %s235, %s236
      %p248 = scmp.eq.s32.totalorder %s32, 1
      %p249 = por %p247, %p248
      %p251 = scmp.ne.s32.totalorder %s236, %s250
      %p252 = scmp.eq.s32.totalorder %s32, 0
      %p253 = por %p251, %p252
      %s255 = sadd.s32 %s254, 1
      %p258 = scmp.eq.s32.totalorder %s26, 1
      %p259 = scmp.ne.s32.totalorder %s254, %s256
      %p260 = scmp.eq.s32.totalorder %s26, 0
      %p261 = por %p259, %p260
      %p262 = scmp.ne.s32.totalorder %s254, %s256
      %p263 = scmp.eq.s32.totalorder %s31, 1
      %p264 = por %p262, %p263
      %p265 = scmp.ne.s32.totalorder %s256, %s257
      %p266 = scmp.eq.s32.totalorder %s31, 0
      %p267 = por %p265, %p266
      %p268 = scmp.ne.s32.totalorder %s256, %s257
      %p269 = scmp.eq.s32.totalorder %s32, 1
      %p270 = por %p268, %p269
      %p272 = scmp.ne.s32.totalorder %s257, %s271
      %p273 = scmp.eq.s32.totalorder %s32, 0
      %p274 = por %p272, %p273
      %s276 = sadd.s32 %s275, 1
      %p279 = scmp.eq.s32.totalorder %s26, 1
      %p280 = scmp.ne.s32.totalorder %s275, %s277
      %p281 = scmp.eq.s32.totalorder %s26, 0
      %p282 = por %p280, %p281
      %p283 = scmp.ne.s32.totalorder %s275, %s277
      %p284 = scmp.eq.s32.totalorder %s31, 1
      %p285 = por %p283, %p284
      %p286 = scmp.ne.s32.totalorder %s277, %s278
      %p287 = scmp.eq.s32.totalorder %s31, 0
      %p288 = por %p286, %p287
      %p289 = scmp.ne.s32.totalorder %s277, %s278
      %p290 = scmp.eq.s32.totalorder %s32, 1
      %p291 = por %p289, %p290
      %p293 = scmp.ne.s32.totalorder %s278, %s292
      %p294 = scmp.eq.s32.totalorder %s32, 0
      %p295 = por %p293, %p294
      %s296 = ssub.s32 %s26, %s33
      %p297 = scmp.eq.s32.totalorder %s296, 0
      %s299 = sadd.s32 %s298, 1
      %s300 = scalar_select %p297, %s298, %s299
      %p303 = pneg %p297
      %p304 = scmp.eq.s32.totalorder %s26, 1
      %p305 = por %p303, %p304
      %p306 = scmp.ne.s32.totalorder %s298, %s301
      %p307 = scmp.eq.s32.totalorder %s26, 0
      %p308 = por %p306, %p307
      %p309 = scmp.ne.s32.totalorder %s298, %s301
      %p310 = scmp.eq.s32.totalorder %s31, 1
      %p311 = por %p309, %p310
      %p312 = scmp.ne.s32.totalorder %s301, %s302
      %p313 = scmp.eq.s32.totalorder %s31, 0
      %p314 = por %p312, %p313
      %p315 = scmp.ne.s32.totalorder %s301, %s302
      %p316 = scmp.eq.s32.totalorder %s32, 1
      %p317 = por %p315, %p316
      %p319 = scmp.ne.s32.totalorder %s302, %s318
      %p320 = scmp.eq.s32.totalorder %s32, 0
      %p321 = por %p319, %p320
      %s322 = ssub.s32 %s26, %s33
      %p323 = scmp.eq.s32.totalorder %s322, 0
      %s325 = sadd.s32 %s324, 1
      %s326 = scalar_select %p323, %s324, %s325
      %p329 = pneg %p323
      %p330 = scmp.eq.s32.totalorder %s26, 1
      %p331 = por %p329, %p330
      %p332 = scmp.ne.s32.totalorder %s324, %s327
      %p333 = scmp.eq.s32.totalorder %s26, 0
      %p334 = por %p332, %p333
      %p335 = scmp.ne.s32.totalorder %s324, %s327
      %p336 = scmp.eq.s32.totalorder %s31, 1
      %p337 = por %p335, %p336
      %p338 = scmp.ne.s32.totalorder %s327, %s328
      %p339 = scmp.eq.s32.totalorder %s31, 0
      %p340 = por %p338, %p339
      %p341 = scmp.ne.s32.totalorder %s327, %s328
      %p342 = scmp.eq.s32.totalorder %s32, 1
      %p343 = por %p341, %p342
      %p345 = scmp.ne.s32.totalorder %s328, %s344
      %p346 = scmp.eq.s32.totalorder %s32, 0
      %p347 = por %p345, %p346
      %p348 = scmp.le.s32.totalorder 1, %s26
      %p349 = scmp.lt.s32.totalorder %s26, 3
      %p350 = pnand %p348, %p349
      %p351 = pneg %p350
      // Predicated region
      $region9: #{dstfnet_forward.1} parent=5 // pred_check
        _
      $region10: #{dstfnet_forward.1} parent=5 // pred_check_branch
        %353 = sbr.rel (%p350) target = $region12
      $region11: #{dstfnet_forward.1} parent=5 // pred_region
        %s354 = ssub.s32 %s26, 1
        // Predicated region
        $region13: #{dstfnet_forward.1} parent=11 // pred_check
          %p355 = pneg %p73
        $region14: #{dstfnet_forward.1} parent=11 // pred_check_branch
          %357 = sbr.rel (%p355) target = $region16
        $region15: #{dstfnet_forward.1} parent=11 // pred_region
          _
        $region16: #{dstfnet_forward.1} parent=11 // pred_fallthru
          _
        // Predicated region
        $region17: #{dstfnet_forward.1} parent=11 // pred_check
          %p358 = pneg %p94
        $region18: #{dstfnet_forward.1} parent=11 // pred_check_branch
          %360 = sbr.rel (%p358) target = $region20
        $region19: #{dstfnet_forward.1} parent=11 // pred_region
          _
        $region20: #{dstfnet_forward.1} parent=11 // pred_fallthru
          _
        // Predicated region
        $region21: #{dstfnet_forward.1} parent=11 // pred_check
          %p361 = pneg %p141
        $region22: #{dstfnet_forward.1} parent=11 // pred_check_branch
          %363 = sbr.rel (%p361) target = $region24
        $region23: #{dstfnet_forward.1} parent=11 // pred_region
          _
        $region24: #{dstfnet_forward.1} parent=11 // pred_fallthru
          _
        // Predicated region
        $region25: #{dstfnet_forward.1} parent=11 // pred_check
          %p364 = pneg %p162
        $region26: #{dstfnet_forward.1} parent=11 // pred_check_branch
          %366 = sbr.rel (%p364) target = $region28
        $region27: #{dstfnet_forward.1} parent=11 // pred_region
          _
        $region28: #{dstfnet_forward.1} parent=11 // pred_fallthru
          _
        // Predicated region
        $region29: #{dstfnet_forward.1} parent=11 // pred_check
          %p367 = pneg %p183
        $region30: #{dstfnet_forward.1} parent=11 // pred_check_branch
          %369 = sbr.rel (%p367) target = $region32
        $region31: #{dstfnet_forward.1} parent=11 // pred_region
          _
        $region32: #{dstfnet_forward.1} parent=11 // pred_fallthru
          _
        // Predicated region
        $region33: #{dstfnet_forward.1} parent=11 // pred_check
          %p370 = pneg %p204
        $region34: #{dstfnet_forward.1} parent=11 // pred_check_branch
          %372 = sbr.rel (%p370) target = $region36
        $region35: #{dstfnet_forward.1} parent=11 // pred_region
          _
        $region36: #{dstfnet_forward.1} parent=11 // pred_fallthru
          _
        // Predicated region
        $region37: #{dstfnet_forward.1} parent=11 // pred_check
          %p373 = pneg %p225
        $region38: #{dstfnet_forward.1} parent=11 // pred_check_branch
          %375 = sbr.rel (%p373) target = $region40
        $region39: #{dstfnet_forward.1} parent=11 // pred_region
          _
        $region40: #{dstfnet_forward.1} parent=11 // pred_fallthru
          _
        // Predicated region
        $region41: #{dstfnet_forward.1} parent=11 // pred_check
          %p376 = pneg %p246
        $region42: #{dstfnet_forward.1} parent=11 // pred_check_branch
          %378 = sbr.rel (%p376) target = $region44
        $region43: #{dstfnet_forward.1} parent=11 // pred_region
          _
        $region44: #{dstfnet_forward.1} parent=11 // pred_fallthru
          _
        // Predicated region
        $region45: #{dstfnet_forward.1} parent=11 // pred_check
          %p379 = pneg %p267
        $region46: #{dstfnet_forward.1} parent=11 // pred_check_branch
          %381 = sbr.rel (%p379) target = $region48
        $region47: #{dstfnet_forward.1} parent=11 // pred_region
          _
        $region48: #{dstfnet_forward.1} parent=11 // pred_fallthru
          _
        // Predicated region
        $region49: #{dstfnet_forward.1} parent=11 // pred_check
          %p382 = pneg %p288
        $region50: #{dstfnet_forward.1} parent=11 // pred_check_branch
          %384 = sbr.rel (%p382) target = $region52
        $region51: #{dstfnet_forward.1} parent=11 // pred_region
          _
        $region52: #{dstfnet_forward.1} parent=11 // pred_fallthru
          _
      $region12: #{dstfnet_forward.1} parent=5 // pred_fallthru
        _
      %p385 = scmp.lt.s32.totalorder %s26, 2
      // Predicated region
      $region53: #{dstfnet_forward.1} parent=5 // pred_check
        %p386 = pneg %p385
      $region54: #{dstfnet_forward.1} parent=5 // pred_check_branch
        %388 = sbr.rel (%p386) target = $region56
      $region55: #{dstfnet_forward.1} parent=5 // pred_region
        // Predicated region
        $region57: #{dstfnet_forward.1} parent=55 // pred_check
          %p389 = pneg %p46
        $region58: #{dstfnet_forward.1} parent=55 // pred_check_branch
          %391 = sbr.rel (%p389) target = $region60
        $region59: #{dstfnet_forward.1} parent=55 // pred_region
          %p392 = scmp.lt.s32.totalorder %s26, 1
          %s393 = scalar_select %p392, %s26, 1
          %s394 = smul.addr %s393, 32
          %s395 = smul.addr %s394, 4
          %s396 = scalar_lea.vmem %s0, %s395
        $region60: #{dstfnet_forward.1} parent=55 // pred_fallthru
          _
        // Predicated region
        $region61: #{dstfnet_forward.1} parent=55 // pred_check
          %p397 = pneg %p114
        $region62: #{dstfnet_forward.1} parent=55 // pred_check_branch
          %399 = sbr.rel (%p397) target = $region64
        $region63: #{dstfnet_forward.1} parent=55 // pred_region
          %p400 = scmp.lt.s32.totalorder %s26, 1
          %s401 = scalar_select %p400, %s26, 1
          %s402 = smul.addr %s401, 4
          %s403 = scalar_lea.vmem %s3, %s402
        $region64: #{dstfnet_forward.1} parent=55 // pred_fallthru
          _
      $region56: #{dstfnet_forward.1} parent=5 // pred_fallthru
        _
      %p404 = scmp.le.s32.totalorder 1, %s26
      %p405 = scmp.lt.s32.totalorder %s26, 3
      %p406 = pnand %p404, %p405
      %p407 = pneg %p406
      // Predicated region
      $region65: #{dstfnet_forward.1} parent=5 // pred_check
        _
      $region66: #{dstfnet_forward.1} parent=5 // pred_check_branch
        %409 = sbr.rel (%p406) target = $region68
      $region67: #{dstfnet_forward.1} parent=5 // pred_region
        %s410 = ssub.s32 %s26, 1
        %p411 = scmp.lt.s32.totalorder %s31, 1
        %s412 = scalar_select %p411, %s31, 1
        %s413 = smul.addr %s412, 32
        %s414 = smul.addr %s413, 4
        %s415 = scalar_lea.vmem %s0, %s414
        %p416 = pneg %p52
        %p417 = pneg %p49
        %p418 = pneg %p73
        %p419 = pneg %p70
        %p420 = pneg %p94
        %p421 = pneg %p91
        %p422 = scmp.lt.s32.totalorder %s31, 1
        %s423 = scalar_select %p422, %s31, 1
        %s424 = smul.addr %s423, 4
        %s425 = scalar_lea.vmem %s3, %s424
        %p426 = pneg %p120
        %p427 = pneg %p117
        %p428 = pneg %p141
        %p429 = pneg %p138
        %p430 = pneg %p162
        %p431 = pneg %p159
        %p432 = pneg %p183
        %p433 = pneg %p180
        %p434 = pneg %p204
        %p435 = pneg %p201
        %p436 = pneg %p225
        %p437 = pneg %p222
        %p438 = pneg %p246
        %p439 = pneg %p243
        %p440 = pneg %p267
        %p441 = pneg %p264
        %p442 = pneg %p288
        %p443 = pneg %p285
        %p444 = pneg %p314
        %p445 = pneg %p311
        %s446 = sand.u32 %s301, 1
        %s447 = scalar_lea.sflag [#allocation3], %s446
        %s448 = sand.u32 %s301, 1
        %s449 = scalar_lea.vmem [#allocation2], %s448
        %p450 = pneg %p340
        %p451 = pneg %p337
        %s452 = sand.u32 %s327, 1
        %s453 = scalar_lea.sflag [#allocation5], %s452
        %s454 = sand.u32 %s327, 1
        %s455 = scalar_lea.vmem [#allocation4], %s454
        %p456 = scmp.lt.s32.totalorder %s31, 1
        %s457 = scalar_select %p456, %s31, 1
        %s458 = smul.addr %s457, 32
        %s459 = smul.addr %s458, 4
        %s460 = scalar_lea.vmem %s0, %s459
        %p461 = scmp.lt.s32.totalorder %s31, 1
        %s462 = scalar_select %p461, %s31, 1
        %s463 = smul.addr %s462, 4
        %s464 = scalar_lea.vmem %s3, %s463
        %v466 = vld [vmem:[%s460] sm:$0xf]
        %v467 = vld [vmem:[%s460 + $0x4] sm:$0xf]
        %v468 = vld [vmem:[%s460 + $0x8] sm:$0xf]
        %v469 = vld [vmem:[%s460 + $0xc] sm:$0xf]
        %v470 = vld [vmem:[%s460 + $0x10] sm:$0xf]
        %v471 = vld [vmem:[%s460 + $0x14] sm:$0xf]
        %v472 = vld [vmem:[%s460 + $0x18] sm:$0xf]
        %v473 = vld [vmem:[%s460 + $0x1c] sm:$0xf]
        %v474 = vld [vmem:[%s460 + $0x20] sm:$0xf]
        %v475 = vld [vmem:[%s460 + $0x24] sm:$0xf]
        %v476 = vld [vmem:[%s460 + $0x28] sm:$0xf]
        %v477 = vld [vmem:[%s460 + $0x2c] sm:$0xf]
        %v478 = vld [vmem:[%s460 + $0x30] sm:$0xf]
        %v479 = vld [vmem:[%s460 + $0x34] sm:$0xf]
        %v480 = vld [vmem:[%s460 + $0x38] sm:$0xf]
        %v481 = vld [vmem:[%s460 + $0x3c] sm:$0xf]
        %v482 = vld [vmem:[%s460 + $0x40] sm:$0xf]
        %v483 = vld [vmem:[%s460 + $0x44] sm:$0xf]
        %v484 = vld [vmem:[%s460 + $0x48] sm:$0xf]
        %v485 = vld [vmem:[%s460 + $0x4c] sm:$0xf]
        %v486 = vld [vmem:[%s460 + $0x50] sm:$0xf]
        %v487 = vld [vmem:[%s460 + $0x54] sm:$0xf]
        %v488 = vld [vmem:[%s460 + $0x58] sm:$0xf]
        %v489 = vld [vmem:[%s460 + $0x5c] sm:$0xf]
        %v490 = vld [vmem:[%s460 + $0x60] sm:$0xf]
        %v491 = vld [vmem:[%s460 + $0x64] sm:$0xf]
        %v492 = vld [vmem:[%s460 + $0x68] sm:$0xf]
        %v493 = vld [vmem:[%s460 + $0x6c] sm:$0xf]
        %v494 = vld [vmem:[%s460 + $0x70] sm:$0xf]
        %v495 = vld [vmem:[%s460 + $0x74] sm:$0xf]
        %v496 = vld [vmem:[%s460 + $0x78] sm:$0xf]
        %v497 = vld [vmem:[%s460 + $0x7c] sm:$0xf]
        %v498 = vld [vmem:[%s1] sm:$0xf]
        %v499 = vld [vmem:[%s1 + $0x4] sm:$0xf]
        %v500 = vld [vmem:[%s1 + $0x8] sm:$0xf]
        %v501 = vld [vmem:[%s1 + $0xc] sm:$0xf]
        %v502 = vld [vmem:[%s1 + $0x10] sm:$0xf]
        %v503 = vld [vmem:[%s1 + $0x14] sm:$0xf]
        %v504 = vld [vmem:[%s1 + $0x18] sm:$0xf]
        %v505 = vld [vmem:[%s1 + $0x1c] sm:$0xf]
        %v506 = vld [vmem:[%s1 + $0x20] sm:$0xf]
        %v507 = vld [vmem:[%s1 + $0x24] sm:$0xf]
        %v508 = vld [vmem:[%s1 + $0x28] sm:$0xf]
        %v509 = vld [vmem:[%s1 + $0x2c] sm:$0xf]
        %v510 = vld [vmem:[%s1 + $0x30] sm:$0xf]
        %v511 = vld [vmem:[%s1 + $0x34] sm:$0xf]
        %v512 = vld [vmem:[%s1 + $0x38] sm:$0xf]
        %v513 = vld [vmem:[%s1 + $0x3c] sm:$0xf]
        %v514 = vld [vmem:[%s2] sm:$0x1]
        %v516 = vlaneseq
        %v517 = vshrl.u32 %v516, 7
        %v518 = vsub.s32 0, %v517
        %v519 = vrot.slane %v514, %v518
        %v553 = vunpack.c.l.b16 %v466
        %v554 = vunpack.c.l.b16 %v467
        %v555 = vunpack.c.l.b16 %v468
        %v556 = vunpack.c.l.b16 %v469
        %v557 = vunpack.c.l.b16 %v470
        %v558 = vunpack.c.l.b16 %v471
        %v559 = vunpack.c.l.b16 %v472
        %v560 = vunpack.c.l.b16 %v473
        %v561 = vunpack.c.l.b16 %v474
        %v562 = vunpack.c.l.b16 %v475
        %v563 = vunpack.c.l.b16 %v476
        %v564 = vunpack.c.l.b16 %v477
        %v565 = vunpack.c.l.b16 %v478
        %v566 = vunpack.c.l.b16 %v479
        %v567 = vunpack.c.l.b16 %v480
        %v568 = vunpack.c.l.b16 %v481
        %v569 = vunpack.c.l.b16 %v482
        %v570 = vunpack.c.l.b16 %v483
        %v571 = vunpack.c.l.b16 %v484
        %v572 = vunpack.c.l.b16 %v485
        %v573 = vunpack.c.l.b16 %v486
        %v574 = vunpack.c.l.b16 %v487
        %v575 = vunpack.c.l.b16 %v488
        %v576 = vunpack.c.l.b16 %v489
        %v577 = vunpack.c.l.b16 %v490
        %v578 = vunpack.c.l.b16 %v491
        %v579 = vunpack.c.l.b16 %v492
        %v580 = vunpack.c.l.b16 %v493
        %v581 = vunpack.c.l.b16 %v494
        %v582 = vunpack.c.l.b16 %v495
        %v583 = vunpack.c.l.b16 %v496
        %v584 = vunpack.c.l.b16 %v497
        %v585 = vpack.c.b16 %v554, %v553
        %v586 = vpack.c.b16 %v556, %v555
        %v587 = vpack.c.b16 %v558, %v557
        %v588 = vpack.c.b16 %v560, %v559
        %v589 = vpack.c.b16 %v562, %v561
        %v590 = vpack.c.b16 %v564, %v563
        %v591 = vpack.c.b16 %v566, %v565
        %v592 = vpack.c.b16 %v568, %v567
        %v593 = vpack.c.b16 %v570, %v569
        %v594 = vpack.c.b16 %v572, %v571
        %v595 = vpack.c.b16 %v574, %v573
        %v596 = vpack.c.b16 %v576, %v575
        %v597 = vpack.c.b16 %v578, %v577
        %v598 = vpack.c.b16 %v580, %v579
        %v599 = vpack.c.b16 %v582, %v581
        %v600 = vpack.c.b16 %v584, %v583
        %v633 = vunpack.c.l.b16 %v498
        %v634 = vunpack.c.l.b16 %v499
        %v635 = vunpack.c.l.b16 %v500
        %v636 = vunpack.c.l.b16 %v501
        %v637 = vunpack.c.l.b16 %v502
        %v638 = vunpack.c.l.b16 %v503
        %v639 = vunpack.c.l.b16 %v504
        %v640 = vunpack.c.l.b16 %v505
        %v641 = vunpack.c.l.b16 %v506
        %v642 = vunpack.c.l.b16 %v507
        %v643 = vunpack.c.l.b16 %v508
        %v644 = vunpack.c.l.b16 %v509
        %v645 = vunpack.c.l.b16 %v510
        %v646 = vunpack.c.l.b16 %v511
        %v647 = vunpack.c.l.b16 %v512
        %v648 = vunpack.c.l.b16 %v513
        %v649 = vpack.c.b16 %v634, %v633
        %v650 = vpack.c.b16 %v636, %v635
        %v651 = vpack.c.b16 %v638, %v637
        %v652 = vpack.c.b16 %v640, %v639
        %v653 = vpack.c.b16 %v642, %v641
        %v654 = vpack.c.b16 %v644, %v643
        %v655 = vpack.c.b16 %v646, %v645
        %v656 = vpack.c.b16 %v648, %v647
        %665 = vmatprep.subr.bf16.mxu0 0
        %666 = vmatpush1.bf16.msra.mxu0 %v656
        %667 = vmatprep.subr.bf16.mxu0 0
        %668 = vmatpush1.bf16.msra.mxu0 %v655
        %669 = vmatprep.subr.bf16.mxu0 0
        %670 = vmatpush1.bf16.msra.mxu0 %v654
        %671 = vmatprep.subr.bf16.mxu0 0
        %672 = vmatpush1.bf16.msra.mxu0 %v653
        %673 = vmatprep.subr.bf16.mxu0 0
        %674 = vmatpush1.bf16.msra.mxu0 %v652
        %675 = vmatprep.subr.bf16.mxu0 0
        %676 = vmatpush1.bf16.msra.mxu0 %v651
        %677 = vmatprep.subr.bf16.mxu0 0
        %678 = vmatpush1.bf16.msra.mxu0 %v650
        %679 = vmatprep.subr.bf16.mxu0 0
        %680 = vmatpush1.bf16.msra.mxu0 %v649
        %681 = vmatprep.subr.bf16.mxu0 0
        %682 = vmatpush2.bf16.msra.mxu0 0
        %683 = vmatprep.subr.bf16.mxu0 0
        %684 = vmatpush2.bf16.msra.mxu0 0
        %685 = vmatprep.subr.bf16.mxu0 0
        %686 = vmatpush2.bf16.msra.mxu0 0
        %687 = vmatprep.subr.bf16.mxu0 0
        %688 = vmatpush2.bf16.msra.mxu0 0
        %689 = vmatprep.subr.bf16.mxu0 0
        %690 = vmatpush2.bf16.msra.mxu0 0
        %691 = vmatprep.subr.bf16.mxu0 0
        %692 = vmatpush2.bf16.msra.mxu0 0
        %693 = vmatprep.subr.bf16.mxu0 0
        %694 = vmatpush2.bf16.msra.mxu0 0
        %695 = vmatprep.subr.bf16.mxu0 0
        %696 = vmatpush2.bf16.msra.mxu0 0
        %697 = vmatprep.mubr.bf16.mxu0 0
        %698 = vmatmul.mubr.bf16.gmra.mxu0 %v585
        %v699 = vpop.f32.mrf.mxu0
        %v700 = vadd.f32 %v519, %v699
        %v701 = vpop.f32.mrf.mxu0
        %v702 = vpop.f32.mrf.mxu0
        %v703 = vadd.f32 %v519, %v702
        %v704 = vpop.f32.mrf.mxu0
        %705 = vmatprep.mubr.bf16.mxu0 0
        %706 = vmatmul.mubr.bf16.gmra.mxu0 %v586
        %v707 = vpop.f32.mrf.mxu0
        %v708 = vadd.f32 %v519, %v707
        %v709 = vpop.f32.mrf.mxu0
        %v710 = vpop.f32.mrf.mxu0
        %v711 = vadd.f32 %v519, %v710
        %v712 = vpop.f32.mrf.mxu0
        %713 = vmatprep.mubr.bf16.mxu0 0
        %714 = vmatmul.mubr.bf16.gmra.mxu0 %v587
        %v715 = vpop.f32.mrf.mxu0
        %v716 = vadd.f32 %v519, %v715
        %v717 = vpop.f32.mrf.mxu0
        %v718 = vpop.f32.mrf.mxu0
        %v719 = vadd.f32 %v519, %v718
        %v720 = vpop.f32.mrf.mxu0
        %721 = vmatprep.mubr.bf16.mxu0 0
        %722 = vmatmul.mubr.bf16.gmra.mxu0 %v588
        %v723 = vpop.f32.mrf.mxu0
        %v724 = vadd.f32 %v519, %v723
        %v725 = vpop.f32.mrf.mxu0
        %v726 = vpop.f32.mrf.mxu0
        %v727 = vadd.f32 %v519, %v726
        %v728 = vpop.f32.mrf.mxu0
        %729 = vmatprep.mubr.bf16.mxu0 0
        %730 = vmatmul.mubr.bf16.gmra.mxu0 %v589
        %v731 = vpop.f32.mrf.mxu0
        %v732 = vadd.f32 %v519, %v731
        %v733 = vpop.f32.mrf.mxu0
        %v734 = vpop.f32.mrf.mxu0
        %v735 = vadd.f32 %v519, %v734
        %v736 = vpop.f32.mrf.mxu0
        %737 = vmatprep.mubr.bf16.mxu0 0
        %738 = vmatmul.mubr.bf16.gmra.mxu0 %v590
        %v739 = vpop.f32.mrf.mxu0
        %v740 = vadd.f32 %v519, %v739
        %v741 = vpop.f32.mrf.mxu0
        %v742 = vpop.f32.mrf.mxu0
        %v743 = vadd.f32 %v519, %v742
        %v744 = vpop.f32.mrf.mxu0
        %745 = vmatprep.mubr.bf16.mxu0 0
        %746 = vmatmul.mubr.bf16.gmra.mxu0 %v591
        %v747 = vpop.f32.mrf.mxu0
        %v748 = vadd.f32 %v519, %v747
        %v749 = vpop.f32.mrf.mxu0
        %v750 = vpop.f32.mrf.mxu0
        %v751 = vadd.f32 %v519, %v750
        %v752 = vpop.f32.mrf.mxu0
        %753 = vmatprep.mubr.bf16.mxu0 0
        %754 = vmatmul.mubr.bf16.gmra.mxu0 %v592
        %v755 = vpop.f32.mrf.mxu0
        %v756 = vadd.f32 %v519, %v755
        %v757 = vpop.f32.mrf.mxu0
        %v758 = vpop.f32.mrf.mxu0
        %v759 = vadd.f32 %v519, %v758
        %v760 = vpop.f32.mrf.mxu0
        %761 = vmatprep.mubr.bf16.mxu0 0
        %762 = vmatmul.mubr.bf16.gmra.mxu0 %v593
        %v763 = vpop.f32.mrf.mxu0
        %v764 = vadd.f32 %v519, %v763
        %v765 = vpop.f32.mrf.mxu0
        %v766 = vpop.f32.mrf.mxu0
        %v767 = vadd.f32 %v519, %v766
        %v768 = vpop.f32.mrf.mxu0
        %769 = vmatprep.mubr.bf16.mxu0 0
        %770 = vmatmul.mubr.bf16.gmra.mxu0 %v594
        %v771 = vpop.f32.mrf.mxu0
        %v772 = vadd.f32 %v519, %v771
        %v773 = vpop.f32.mrf.mxu0
        %v774 = vpop.f32.mrf.mxu0
        %v775 = vadd.f32 %v519, %v774
        %v776 = vpop.f32.mrf.mxu0
        %777 = vmatprep.mubr.bf16.mxu0 0
        %778 = vmatmul.mubr.bf16.gmra.mxu0 %v595
        %v779 = vpop.f32.mrf.mxu0
        %v780 = vadd.f32 %v519, %v779
        %v781 = vpop.f32.mrf.mxu0
        %v782 = vpop.f32.mrf.mxu0
        %v783 = vadd.f32 %v519, %v782
        %v784 = vpop.f32.mrf.mxu0
        %785 = vmatprep.mubr.bf16.mxu0 0
        %786 = vmatmul.mubr.bf16.gmra.mxu0 %v596
        %v787 = vpop.f32.mrf.mxu0
        %v788 = vadd.f32 %v519, %v787
        %v789 = vpop.f32.mrf.mxu0
        %v790 = vpop.f32.mrf.mxu0
        %v791 = vadd.f32 %v519, %v790
        %v792 = vpop.f32.mrf.mxu0
        %793 = vmatprep.mubr.bf16.mxu0 0
        %794 = vmatmul.mubr.bf16.gmra.mxu0 %v597
        %v795 = vpop.f32.mrf.mxu0
        %v796 = vadd.f32 %v519, %v795
        %v797 = vpop.f32.mrf.mxu0
        %v798 = vpop.f32.mrf.mxu0
        %v799 = vadd.f32 %v519, %v798
        %v800 = vpop.f32.mrf.mxu0
        %801 = vmatprep.mubr.bf16.mxu0 0
        %802 = vmatmul.mubr.bf16.gmra.mxu0 %v598
        %v803 = vpop.f32.mrf.mxu0
        %v804 = vadd.f32 %v519, %v803
        %v805 = vpop.f32.mrf.mxu0
        %v806 = vpop.f32.mrf.mxu0
        %v807 = vadd.f32 %v519, %v806
        %v808 = vpop.f32.mrf.mxu0
        %809 = vmatprep.mubr.bf16.mxu0 0
        %810 = vmatmul.mubr.bf16.gmra.mxu0 %v599
        %v811 = vpop.f32.mrf.mxu0
        %v812 = vadd.f32 %v519, %v811
        %v813 = vpop.f32.mrf.mxu0
        %v814 = vpop.f32.mrf.mxu0
        %v815 = vadd.f32 %v519, %v814
        %v816 = vpop.f32.mrf.mxu0
        %817 = vmatprep.mubr.bf16.mxu0 0
        %818 = vmatmul.mubr.bf16.gmra.mxu0 %v600
        %v819 = vpop.f32.mrf.mxu0
        %v820 = vadd.f32 %v519, %v819
        %v821 = vpop.f32.mrf.mxu0
        %v822 = vpop.f32.mrf.mxu0
        %v823 = vadd.f32 %v519, %v822
        %v824 = vpop.f32.mrf.mxu0
        %825 = vdwg.mxu0
        %v826 = vmax.f32 %v700, 0.0
        %v827 = vmax.f32 %v703, 0.0
        %v828 = vmax.f32 %v708, 0.0
        %v829 = vmax.f32 %v711, 0.0
        %v830 = vmax.f32 %v716, 0.0
        %v831 = vmax.f32 %v719, 0.0
        %v832 = vmax.f32 %v724, 0.0
        %v833 = vmax.f32 %v727, 0.0
        %v834 = vmax.f32 %v732, 0.0
        %v835 = vmax.f32 %v735, 0.0
        %v836 = vmax.f32 %v740, 0.0
        %v837 = vmax.f32 %v743, 0.0
        %v838 = vmax.f32 %v748, 0.0
        %v839 = vmax.f32 %v751, 0.0
        %v840 = vmax.f32 %v756, 0.0
        %v841 = vmax.f32 %v759, 0.0
        %v842 = vmax.f32 %v764, 0.0
        %v843 = vmax.f32 %v767, 0.0
        %v844 = vmax.f32 %v772, 0.0
        %v845 = vmax.f32 %v775, 0.0
        %v846 = vmax.f32 %v780, 0.0
        %v847 = vmax.f32 %v783, 0.0
        %v848 = vmax.f32 %v788, 0.0
        %v849 = vmax.f32 %v791, 0.0
        %v850 = vmax.f32 %v796, 0.0
        %v851 = vmax.f32 %v799, 0.0
        %v852 = vmax.f32 %v804, 0.0
        %v853 = vmax.f32 %v807, 0.0
        %v854 = vmax.f32 %v812, 0.0
        %v855 = vmax.f32 %v815, 0.0
        %v856 = vmax.f32 %v820, 0.0
        %v857 = vmax.f32 %v823, 0.0
        %v858 = vadd.f32 %v826, %v827
        %v859 = vadd.f32 %v858, %v828
        %v860 = vadd.f32 %v859, %v829
        %v861 = vadd.f32 %v860, %v830
        %v862 = vadd.f32 %v861, %v831
        %v863 = vadd.f32 %v862, %v832
        %v864 = vadd.f32 %v863, %v833
        %v865 = vadd.f32 %v864, %v834
        %v866 = vadd.f32 %v865, %v835
        %v867 = vadd.f32 %v866, %v836
        %v868 = vadd.f32 %v867, %v837
        %v869 = vadd.f32 %v868, %v838
        %v870 = vadd.f32 %v869, %v839
        %v871 = vadd.f32 %v870, %v840
        %v872 = vadd.f32 %v871, %v841
        %v873 = vadd.f32 %v872, %v842
        %v874 = vadd.f32 %v873, %v843
        %v875 = vadd.f32 %v874, %v844
        %v876 = vadd.f32 %v875, %v845
        %v877 = vadd.f32 %v876, %v846
        %v878 = vadd.f32 %v877, %v847
        %v879 = vadd.f32 %v878, %v848
        %v880 = vadd.f32 %v879, %v849
        %v881 = vadd.f32 %v880, %v850
        %v882 = vadd.f32 %v881, %v851
        %v883 = vadd.f32 %v882, %v852
        %v884 = vadd.f32 %v883, %v853
        %v885 = vadd.f32 %v884, %v854
        %v886 = vadd.f32 %v885, %v855
        %v887 = vadd.f32 %v886, %v856
        %v888 = vadd.f32 %v887, %v857
        %v889 = vrot.slane %v888, 4
        %v890 = vadd.f32 %v888, %v889
        %v891 = vrot.slane %v890, 2
        %v892 = vadd.f32 %v890, %v891
        %v893 = vrot.slane %v892, 1
        %v894 = vadd.f32 %v892, %v893
        %v895 = vrcp.pop 256.0
        %v896 = vmul.f32 %v894, %v895
        %v897 = vld [vmem:[%s464] sm:$0xf]
        %v898 = vld [vmem:[%s8] sm:$0xf]
        %v899 = vld [vmem:[%s8 + $0x4] sm:$0xf]
        %v900 = vld [vmem:[%s8 + $0x8] sm:$0xf]
        %v901 = vld [vmem:[%s8 + $0xc] sm:$0xf]
        %v902 = vld [vmem:[%s8 + $0x10] sm:$0xf]
        %v903 = vld [vmem:[%s8 + $0x14] sm:$0xf]
        %v904 = vld [vmem:[%s8 + $0x18] sm:$0xf]
        %v905 = vld [vmem:[%s8 + $0x1c] sm:$0xf]
        %v906 = vld [vmem:[%s8 + $0x20] sm:$0xf]
        %v907 = vld [vmem:[%s8 + $0x24] sm:$0xf]
        %v908 = vld [vmem:[%s8 + $0x28] sm:$0xf]
        %v909 = vld [vmem:[%s8 + $0x2c] sm:$0xf]
        %v910 = vld [vmem:[%s8 + $0x30] sm:$0xf]
        %v911 = vld [vmem:[%s8 + $0x34] sm:$0xf]
        %v912 = vld [vmem:[%s8 + $0x38] sm:$0xf]
        %v913 = vld [vmem:[%s8 + $0x3c] sm:$0xf]
        %v914 = vld [vmem:[%s9] sm:$0x1]
        %v916 = vlaneseq
        %v917 = vshrl.u32 %v916, 7
        %v918 = vsub.s32 0, %v917
        %v919 = vrot.slane %v914, %v918
        %v937 = vunpack.c.l.b16 %v898
        %v938 = vunpack.c.l.b16 %v899
        %v939 = vunpack.c.l.b16 %v900
        %v940 = vunpack.c.l.b16 %v901
        %v941 = vunpack.c.l.b16 %v902
        %v942 = vunpack.c.l.b16 %v903
        %v943 = vunpack.c.l.b16 %v904
        %v944 = vunpack.c.l.b16 %v905
        %v945 = vunpack.c.l.b16 %v906
        %v946 = vunpack.c.l.b16 %v907
        %v947 = vunpack.c.l.b16 %v908
        %v948 = vunpack.c.l.b16 %v909
        %v949 = vunpack.c.l.b16 %v910
        %v950 = vunpack.c.l.b16 %v911
        %v951 = vunpack.c.l.b16 %v912
        %v952 = vunpack.c.l.b16 %v913
        %v953 = vpack.c.b16 %v938, %v937
        %v954 = vpack.c.b16 %v940, %v939
        %v955 = vpack.c.b16 %v942, %v941
        %v956 = vpack.c.b16 %v944, %v943
        %v957 = vpack.c.b16 %v946, %v945
        %v958 = vpack.c.b16 %v948, %v947
        %v959 = vpack.c.b16 %v950, %v949
        %v960 = vpack.c.b16 %v952, %v951
        %969 = vmatprep.subr.bf16.mxu0 0
        %970 = vmatpush1.bf16.msra.mxu0 %v960
        %971 = vmatprep.subr.bf16.mxu0 0
        %972 = vmatpush1.bf16.msra.mxu0 %v959
        %973 = vmatprep.subr.bf16.mxu0 0
        %974 = vmatpush1.bf16.msra.mxu0 %v958
        %975 = vmatprep.subr.bf16.mxu0 0
        %976 = vmatpush1.bf16.msra.mxu0 %v957
        %977 = vmatprep.subr.bf16.mxu0 0
        %978 = vmatpush1.bf16.msra.mxu0 %v956
        %979 = vmatprep.subr.bf16.mxu0 0
        %980 = vmatpush1.bf16.msra.mxu0 %v955
        %981 = vmatprep.subr.bf16.mxu0 0
        %982 = vmatpush1.bf16.msra.mxu0 %v954
        %983 = vmatprep.subr.bf16.mxu0 0
        %984 = vmatpush1.bf16.msra.mxu0 %v953
        %985 = vmatprep.subr.bf16.mxu0 0
        %986 = vmatpush2.bf16.msra.mxu0 0
        %987 = vmatprep.subr.bf16.mxu0 0
        %988 = vmatpush2.bf16.msra.mxu0 0
        %989 = vmatprep.subr.bf16.mxu0 0
        %990 = vmatpush2.bf16.msra.mxu0 0
        %991 = vmatprep.subr.bf16.mxu0 0
        %992 = vmatpush2.bf16.msra.mxu0 0
        %993 = vmatprep.subr.bf16.mxu0 0
        %994 = vmatpush2.bf16.msra.mxu0 0
        %995 = vmatprep.subr.bf16.mxu0 0
        %996 = vmatpush2.bf16.msra.mxu0 0
        %997 = vmatprep.subr.bf16.mxu0 0
        %998 = vmatpush2.bf16.msra.mxu0 0
        %999 = vmatprep.subr.bf16.mxu0 0
        %1000 = vmatpush2.bf16.msra.mxu0 0
        %1001 = vmatprep.mubr.bf16.mxu0 0
        %1002 = vmatmul.mubr.bf16.gmra.mxu0 %v897
        %v1003 = vpop.f32.mrf.mxu0
        %v1004 = vadd.f32 %v919, %v1003
        %v1005 = vpop.f32.mrf.mxu0
        %v1006 = vpop.f32.mrf.mxu0
        %v1007 = vpop.f32.mrf.mxu0
        %1008 = vdwg.mxu0
        %v1009 = vmax.f32 %v1004, 0.0
        %v1010 = vld [vmem:[%s10] sm:$0xf]
        %v1011 = vld [vmem:[%s10 + $0x4] sm:$0xf]
        %v1012 = vld [vmem:[%s10 + $0x8] sm:$0xf]
        %v1013 = vld [vmem:[%s10 + $0xc] sm:$0xf]
        %v1014 = vld [vmem:[%s10 + $0x10] sm:$0xf]
        %v1015 = vld [vmem:[%s10 + $0x14] sm:$0xf]
        %v1016 = vld [vmem:[%s10 + $0x18] sm:$0xf]
        %v1017 = vld [vmem:[%s10 + $0x1c] sm:$0xf]
        %v1018 = vld [vmem:[%s10 + $0x20] sm:$0xf]
        %v1019 = vld [vmem:[%s10 + $0x24] sm:$0xf]
        %v1020 = vld [vmem:[%s10 + $0x28] sm:$0xf]
        %v1021 = vld [vmem:[%s10 + $0x2c] sm:$0xf]
        %v1022 = vld [vmem:[%s10 + $0x30] sm:$0xf]
        %v1023 = vld [vmem:[%s10 + $0x34] sm:$0xf]
        %v1024 = vld [vmem:[%s10 + $0x38] sm:$0xf]
        %v1025 = vld [vmem:[%s10 + $0x3c] sm:$0xf]
        %v1026 = vld [vmem:[%s11] sm:$0x1]
        %v1027 = vpack.c.bf16 %v1009, %v1009
        %v1029 = vlaneseq
        %v1030 = vshrl.u32 %v1029, 7
        %v1031 = vsub.s32 0, %v1030
        %v1032 = vrot.slane %v1026, %v1031
        %v1050 = vunpack.c.l.b16 %v1010
        %v1051 = vunpack.c.l.b16 %v1011
        %v1052 = vunpack.c.l.b16 %v1012
        %v1053 = vunpack.c.l.b16 %v1013
        %v1054 = vunpack.c.l.b16 %v1014
        %v1055 = vunpack.c.l.b16 %v1015
        %v1056 = vunpack.c.l.b16 %v1016
        %v1057 = vunpack.c.l.b16 %v1017
        %v1058 = vunpack.c.l.b16 %v1018
        %v1059 = vunpack.c.l.b16 %v1019
        %v1060 = vunpack.c.l.b16 %v1020
        %v1061 = vunpack.c.l.b16 %v1021
        %v1062 = vunpack.c.l.b16 %v1022
        %v1063 = vunpack.c.l.b16 %v1023
        %v1064 = vunpack.c.l.b16 %v1024
        %v1065 = vunpack.c.l.b16 %v1025
        %v1066 = vpack.c.b16 %v1051, %v1050
        %v1067 = vpack.c.b16 %v1053, %v1052
        %v1068 = vpack.c.b16 %v1055, %v1054
        %v1069 = vpack.c.b16 %v1057, %v1056
        %v1070 = vpack.c.b16 %v1059, %v1058
        %v1071 = vpack.c.b16 %v1061, %v1060
        %v1072 = vpack.c.b16 %v1063, %v1062
        %v1073 = vpack.c.b16 %v1065, %v1064
        %1082 = vmatprep.subr.bf16.mxu0 0
        %1083 = vmatpush1.bf16.msra.mxu0 %v1073
        %1084 = vmatprep.subr.bf16.mxu0 0
        %1085 = vmatpush1.bf16.msra.mxu0 %v1072
        %1086 = vmatprep.subr.bf16.mxu0 0
        %1087 = vmatpush1.bf16.msra.mxu0 %v1071
        %1088 = vmatprep.subr.bf16.mxu0 0
        %1089 = vmatpush1.bf16.msra.mxu0 %v1070
        %1090 = vmatprep.subr.bf16.mxu0 0
        %1091 = vmatpush1.bf16.msra.mxu0 %v1069
        %1092 = vmatprep.subr.bf16.mxu0 0
        %1093 = vmatpush1.bf16.msra.mxu0 %v1068
        %1094 = vmatprep.subr.bf16.mxu0 0
        %1095 = vmatpush1.bf16.msra.mxu0 %v1067
        %1096 = vmatprep.subr.bf16.mxu0 0
        %1097 = vmatpush1.bf16.msra.mxu0 %v1066
        %1098 = vmatprep.subr.bf16.mxu0 0
        %1099 = vmatpush2.bf16.msra.mxu0 0
        %1100 = vmatprep.subr.bf16.mxu0 0
        %1101 = vmatpush2.bf16.msra.mxu0 0
        %1102 = vmatprep.subr.bf16.mxu0 0
        %1103 = vmatpush2.bf16.msra.mxu0 0
        %1104 = vmatprep.subr.bf16.mxu0 0
        %1105 = vmatpush2.bf16.msra.mxu0 0
        %1106 = vmatprep.subr.bf16.mxu0 0
        %1107 = vmatpush2.bf16.msra.mxu0 0
        %1108 = vmatprep.subr.bf16.mxu0 0
        %1109 = vmatpush2.bf16.msra.mxu0 0
        %1110 = vmatprep.subr.bf16.mxu0 0
        %1111 = vmatpush2.bf16.msra.mxu0 0
        %1112 = vmatprep.subr.bf16.mxu0 0
        %1113 = vmatpush2.bf16.msra.mxu0 0
        %1114 = vmatprep.mubr.bf16.mxu0 0
        %1115 = vmatmul.mubr.bf16.gmra.mxu0 %v1027
        %v1116 = vpop.f32.mrf.mxu0
        %v1117 = vadd.f32 %v1032, %v1116
        %v1118 = vpop.f32.mrf.mxu0
        %v1119 = vpop.f32.mrf.mxu0
        %v1120 = vpop.f32.mrf.mxu0
        %1121 = vdwg.mxu0
        %v1122 = vmax.f32 %v1117, 0.0
        %v1123 = vld [vmem:[%s4] sm:$0x1]
        %1124 = vmatprep.subr.mxu0 0.0
        %1125 = vmatpush1.xpose.msra.mxu0 0.0
        %1126 = vmatprep.subr.mxu0 0.0
        %1127 = vmatpush1.xpose.msra.mxu0 0.0
        %1128 = vmatprep.subr.mxu0 0.0
        %1129 = vmatpush1.xpose.msra.mxu0 0.0
        %1130 = vmatprep.subr.mxu0 0.0
        %1131 = vmatpush1.xpose.msra.mxu0 0.0
        %1132 = vmatprep.subr.mxu0 0.0
        %1133 = vmatpush1.xpose.msra.mxu0 0.0
        %1134 = vmatprep.subr.mxu0 0.0
        %1135 = vmatpush1.xpose.msra.mxu0 0.0
        %1136 = vmatprep.subr.mxu0 0.0
        %1137 = vmatpush1.xpose.msra.mxu0 0.0
        %1138 = vmatprep.subr.mxu0 0.0
        %1139 = vmatpush1.xpose.msra.mxu0 0.0
        %1140 = vmatprep.subr.mxu0 0.0
        %1141 = vmatpush1.xpose.msra.mxu0 0.0
        %1142 = vmatprep.subr.mxu0 0.0
        %1143 = vmatpush1.xpose.msra.mxu0 0.0
        %1144 = vmatprep.subr.mxu0 0.0
        %1145 = vmatpush1.xpose.msra.mxu0 0.0
        %1146 = vmatprep.subr.mxu0 0.0
        %1147 = vmatpush1.xpose.msra.mxu0 0.0
        %1148 = vmatprep.subr.mxu0 0.0
        %1149 = vmatpush1.xpose.msra.mxu0 0.0
        %1150 = vmatprep.subr.mxu0 0.0
        %1151 = vmatpush1.xpose.msra.mxu0 0.0
        %1152 = vmatprep.subr.mxu0 0.0
        %1153 = vmatpush1.xpose.msra.mxu0 0.0
        %1154 = vmatprep.subr.mxu0 0.0
        %1155 = vmatpush1.xpose.msra.mxu0 %v1122
        %1156 = vmatprep.subr.mxu0 0.0
        %1157 = vmatpush2.xpose.msra.mxu0 0.0
        %1158 = vmatprep.subr.mxu0 0.0
        %1159 = vmatpush2.xpose.msra.mxu0 0.0
        %1160 = vmatprep.subr.mxu0 0.0
        %1161 = vmatpush2.xpose.msra.mxu0 0.0
        %1162 = vmatprep.subr.mxu0 0.0
        %1163 = vmatpush2.xpose.msra.mxu0 0.0
        %1164 = vmatprep.subr.mxu0 0.0
        %1165 = vmatpush2.xpose.msra.mxu0 0.0
        %1166 = vmatprep.subr.mxu0 0.0
        %1167 = vmatpush2.xpose.msra.mxu0 0.0
        %1168 = vmatprep.subr.mxu0 0.0
        %1169 = vmatpush2.xpose.msra.mxu0 0.0
        %1170 = vmatprep.subr.mxu0 0.0
        %1171 = vmatpush2.xpose.msra.mxu0 0.0
        %1172 = vmatprep.subr.mxu0 0.0
        %1173 = vmatpush2.xpose.msra.mxu0 0.0
        %1174 = vmatprep.subr.mxu0 0.0
        %1175 = vmatpush2.xpose.msra.mxu0 0.0
        %1176 = vmatprep.subr.mxu0 0.0
        %1177 = vmatpush2.xpose.msra.mxu0 0.0
        %1178 = vmatprep.subr.mxu0 0.0
        %1179 = vmatpush2.xpose.msra.mxu0 0.0
        %1180 = vmatprep.subr.mxu0 0.0
        %1181 = vmatpush2.xpose.msra.mxu0 0.0
        %1182 = vmatprep.subr.mxu0 0.0
        %1183 = vmatpush2.xpose.msra.mxu0 0.0
        %1184 = vmatprep.subr.mxu0 0.0
        %1185 = vmatpush2.xpose.msra.mxu0 0.0
        %1186 = vmatprep.subr.mxu0 0.0
        %1187 = vmatpush2.xpose.msra.mxu0 0.0
        %1188 = vmatprep.mubr.f32.mxu0 0.0
        %1189 = vmatmul.mubr.f32.gmra.mxu0 %v1123
        %v1190 = vpop.f32.mrf.mxu0
        %v1191 = vadd.f32 0.0, %v1190
        %v1192 = vpop.f32.mrf.mxu0
        %1193 = vdwg.mxu0
        %vm1194 = vcmask 57344
        %v1195 = vsel %vm1194, %v1191, -inf
        %1196 = vmax.xlane.f32.xlu0 %v1195
        %v1197 = vpop.xlane.xlu0 %1196
        %v1198 = vsub.f32 %v1191, %v1197
        %v1199 = vmul.f32 %v1198, 1.442695
        %v1200 = vpow.pop %v1199
        %v1201 = vsel %vm1194, %v1200, 0.0
        %1202 = vadd.xlane.f32.xlu0 %v1201
        %v1203 = vpop.xlane.xlu0 %1202
        %v1204 = vrcp.pop %v1203
        %v1205 = vmul.f32 %v1200, %v1204
        %vm1206 = vcmask 64512
        %v1208 = vsel %vm1206, %v1205, 0
        %1210 = vmatprep.subr.mxu0 0.0
        %1211 = vmatpush1.msra.mxu0 0.0
        %1212 = vmatprep.subr.mxu0 0.0
        %1213 = vmatpush1.msra.mxu0 0.0
        %1214 = vmatprep.subr.mxu0 0.0
        %1215 = vmatpush1.msra.mxu0 0.0
        %1216 = vmatprep.subr.mxu0 0.0
        %1217 = vmatpush1.msra.mxu0 0.0
        %1218 = vmatprep.subr.mxu0 0.0
        %1219 = vmatpush1.msra.mxu0 0.0
        %1220 = vmatprep.subr.mxu0 0.0
        %1221 = vmatpush1.msra.mxu0 0.0
        %1222 = vmatprep.subr.mxu0 0.0
        %1223 = vmatpush1.msra.mxu0 0.0
        %1224 = vmatprep.subr.mxu0 0.0
        %1225 = vmatpush1.msra.mxu0 0.0
        %1226 = vmatprep.subr.mxu0 0.0
        %1227 = vmatpush1.msra.mxu0 0.0
        %1228 = vmatprep.subr.mxu0 0.0
        %1229 = vmatpush1.msra.mxu0 0.0
        %1230 = vmatprep.subr.mxu0 0.0
        %1231 = vmatpush1.msra.mxu0 0.0
        %1232 = vmatprep.subr.mxu0 0.0
        %1233 = vmatpush1.msra.mxu0 0.0
        %1234 = vmatprep.subr.mxu0 0.0
        %1235 = vmatpush1.msra.mxu0 0.0
        %1236 = vmatprep.subr.mxu0 0.0
        %1237 = vmatpush1.msra.mxu0 0.0
        %1238 = vmatprep.subr.mxu0 0.0
        %1239 = vmatpush1.msra.mxu0 0.0
        %1240 = vmatprep.subr.mxu0 0.0
        %1241 = vmatpush1.msra.mxu0 %v1122
        %1242 = vmatprep.subr.mxu0 0.0
        %1243 = vmatpush2.msra.mxu0 0.0
        %1244 = vmatprep.subr.mxu0 0.0
        %1245 = vmatpush2.msra.mxu0 0.0
        %1246 = vmatprep.subr.mxu0 0.0
        %1247 = vmatpush2.msra.mxu0 0.0
        %1248 = vmatprep.subr.mxu0 0.0
        %1249 = vmatpush2.msra.mxu0 0.0
        %1250 = vmatprep.subr.mxu0 0.0
        %1251 = vmatpush2.msra.mxu0 0.0
        %1252 = vmatprep.subr.mxu0 0.0
        %1253 = vmatpush2.msra.mxu0 0.0
        %1254 = vmatprep.subr.mxu0 0.0
        %1255 = vmatpush2.msra.mxu0 0.0
        %1256 = vmatprep.subr.mxu0 0.0
        %1257 = vmatpush2.msra.mxu0 0.0
        %1258 = vmatprep.subr.mxu0 0.0
        %1259 = vmatpush2.msra.mxu0 0.0
        %1260 = vmatprep.subr.mxu0 0.0
        %1261 = vmatpush2.msra.mxu0 0.0
        %1262 = vmatprep.subr.mxu0 0.0
        %1263 = vmatpush2.msra.mxu0 0.0
        %1264 = vmatprep.subr.mxu0 0.0
        %1265 = vmatpush2.msra.mxu0 0.0
        %1266 = vmatprep.subr.mxu0 0.0
        %1267 = vmatpush2.msra.mxu0 0.0
        %1268 = vmatprep.subr.mxu0 0.0
        %1269 = vmatpush2.msra.mxu0 0.0
        %1270 = vmatprep.subr.mxu0 0.0
        %1271 = vmatpush2.msra.mxu0 0.0
        %1272 = vmatprep.subr.mxu0 0.0
        %1273 = vmatpush2.msra.mxu0 0.0
        %1274 = vmatprep.mubr.f32.mxu0 0.0
        %1275 = vmatmul.mubr.f32.gmra.mxu0 %v1208
        %v1276 = vpop.f32.mrf.mxu0
        %v1277 = vadd.f32 0.0, %v1276
        %v1278 = vpop.f32.mrf.mxu0
        %1279 = vdwg.mxu0
        %v1280 = vld [vmem:[%s5] sm:$0xff]
        %v1281 = vld [vmem:[%s5 + $0x8] sm:$0xff]
        %v1282 = vld [vmem:[%s5 + $0x10] sm:$0xff]
        %v1283 = vld [vmem:[%s5 + $0x18] sm:$0xff]
        %v1284 = vld [vmem:[%s5 + $0x20] sm:$0xff]
        %v1285 = vld [vmem:[%s5 + $0x28] sm:$0xff]
        %v1286 = vld [vmem:[%s5 + $0x30] sm:$0xff]
        %v1287 = vld [vmem:[%s5 + $0x38] sm:$0xff]
        %v1288 = vld [vmem:[%s5 + $0x40] sm:$0xff]
        %v1289 = vld [vmem:[%s5 + $0x48] sm:$0xff]
        %v1290 = vld [vmem:[%s5 + $0x50] sm:$0xff]
        %v1291 = vld [vmem:[%s5 + $0x58] sm:$0xff]
        %v1292 = vld [vmem:[%s5 + $0x60] sm:$0xff]
        %v1293 = vld [vmem:[%s5 + $0x68] sm:$0xff]
        %v1294 = vld [vmem:[%s5 + $0x70] sm:$0xff]
        %v1295 = vld [vmem:[%s5 + $0x78] sm:$0xff]
        %v1296 = vld [vmem:[%s6] sm:$0xff]
        %v1297 = vld [vmem:[%s6 + $0x8] sm:$0xff]
        %v1298 = vld [vmem:[%s6 + $0x10] sm:$0xff]
        %v1299 = vld [vmem:[%s6 + $0x18] sm:$0xff]
        %v1300 = vld [vmem:[%s6 + $0x20] sm:$0xff]
        %v1301 = vld [vmem:[%s6 + $0x28] sm:$0xff]
        %v1302 = vld [vmem:[%s6 + $0x30] sm:$0xff]
        %v1303 = vld [vmem:[%s6 + $0x38] sm:$0xff]
        %v1304 = vld [vmem:[%s6 + $0x40] sm:$0xff]
        %v1305 = vld [vmem:[%s6 + $0x48] sm:$0xff]
        %v1306 = vld [vmem:[%s6 + $0x50] sm:$0xff]
        %v1307 = vld [vmem:[%s6 + $0x58] sm:$0xff]
        %v1308 = vld [vmem:[%s6 + $0x60] sm:$0xff]
        %v1309 = vld [vmem:[%s6 + $0x68] sm:$0xff]
        %v1310 = vld [vmem:[%s6 + $0x70] sm:$0xff]
        %v1311 = vld [vmem:[%s6 + $0x78] sm:$0xff]
        %1312 = vmatprep.subr.mxu0 0.0
        %1313 = vmatpush1.msra.mxu0 %v1311
        %1314 = vmatprep.subr.mxu0 0.0
        %1315 = vmatpush1.msra.mxu0 %v1310
        %1316 = vmatprep.subr.mxu0 0.0
        %1317 = vmatpush1.msra.mxu0 %v1309
        %1318 = vmatprep.subr.mxu0 0.0
        %1319 = vmatpush1.msra.mxu0 %v1308
        %1320 = vmatprep.subr.mxu0 0.0
        %1321 = vmatpush1.msra.mxu0 %v1307
        %1322 = vmatprep.subr.mxu0 0.0
        %1323 = vmatpush1.msra.mxu0 %v1306
        %1324 = vmatprep.subr.mxu0 0.0
        %1325 = vmatpush1.msra.mxu0 %v1305
        %1326 = vmatprep.subr.mxu0 0.0
        %1327 = vmatpush1.msra.mxu0 %v1304
        %1328 = vmatprep.subr.mxu0 0.0
        %1329 = vmatpush1.msra.mxu0 %v1303
        %1330 = vmatprep.subr.mxu0 0.0
        %1331 = vmatpush1.msra.mxu0 %v1302
        %1332 = vmatprep.subr.mxu0 0.0
        %1333 = vmatpush1.msra.mxu0 %v1301
        %1334 = vmatprep.subr.mxu0 0.0
        %1335 = vmatpush1.msra.mxu0 %v1300
        %1336 = vmatprep.subr.mxu0 0.0
        %1337 = vmatpush1.msra.mxu0 %v1299
        %1338 = vmatprep.subr.mxu0 0.0
        %1339 = vmatpush1.msra.mxu0 %v1298
        %1340 = vmatprep.subr.mxu0 0.0
        %1341 = vmatpush1.msra.mxu0 %v1297
        %1342 = vmatprep.subr.mxu0 0.0
        %1343 = vmatpush1.msra.mxu0 %v1296
        %1344 = vmatprep.subr.mxu0 0.0
        %1345 = vmatpush2.msra.mxu0 0.0
        %1346 = vmatprep.subr.mxu0 0.0
        %1347 = vmatpush2.msra.mxu0 0.0
        %1348 = vmatprep.subr.mxu0 0.0
        %1349 = vmatpush2.msra.mxu0 0.0
        %1350 = vmatprep.subr.mxu0 0.0
        %1351 = vmatpush2.msra.mxu0 0.0
        %1352 = vmatprep.subr.mxu0 0.0
        %1353 = vmatpush2.msra.mxu0 0.0
        %1354 = vmatprep.subr.mxu0 0.0
        %1355 = vmatpush2.msra.mxu0 0.0
        %1356 = vmatprep.subr.mxu0 0.0
        %1357 = vmatpush2.msra.mxu0 0.0
        %1358 = vmatprep.subr.mxu0 0.0
        %1359 = vmatpush2.msra.mxu0 0.0
        %1360 = vmatprep.subr.mxu0 0.0
        %1361 = vmatpush2.msra.mxu0 0.0
        %1362 = vmatprep.subr.mxu0 0.0
        %1363 = vmatpush2.msra.mxu0 0.0
        %1364 = vmatprep.subr.mxu0 0.0
        %1365 = vmatpush2.msra.mxu0 0.0
        %1366 = vmatprep.subr.mxu0 0.0
        %1367 = vmatpush2.msra.mxu0 0.0
        %1368 = vmatprep.subr.mxu0 0.0
        %1369 = vmatpush2.msra.mxu0 0.0
        %1370 = vmatprep.subr.mxu0 0.0
        %1371 = vmatpush2.msra.mxu0 0.0
        %1372 = vmatprep.subr.mxu0 0.0
        %1373 = vmatpush2.msra.mxu0 0.0
        %1374 = vmatprep.subr.mxu0 0.0
        %1375 = vmatpush2.msra.mxu0 0.0
        %1376 = vmatprep.mubr.f32.mxu0 0.0
        %1377 = vmatmul.mubr.f32.gmra.mxu0 %v1277
        %v1378 = vpop.f32.mrf.mxu0
        %v1379 = vadd.f32 0.0, %v1378
        %v1380 = vpop.f32.mrf.mxu0
        %1381 = vdwg.mxu0
        %1382 = vmatprep.subr.mxu0 0.0
        %1383 = vmatpush1.msra.mxu0 %v1295
        %1384 = vmatprep.subr.mxu0 0.0
        %1385 = vmatpush1.msra.mxu0 %v1294
        %1386 = vmatprep.subr.mxu0 0.0
        %1387 = vmatpush1.msra.mxu0 %v1293
        %1388 = vmatprep.subr.mxu0 0.0
        %1389 = vmatpush1.msra.mxu0 %v1292
        %1390 = vmatprep.subr.mxu0 0.0
        %1391 = vmatpush1.msra.mxu0 %v1291
        %1392 = vmatprep.subr.mxu0 0.0
        %1393 = vmatpush1.msra.mxu0 %v1290
        %1394 = vmatprep.subr.mxu0 0.0
        %1395 = vmatpush1.msra.mxu0 %v1289
        %1396 = vmatprep.subr.mxu0 0.0
        %1397 = vmatpush1.msra.mxu0 %v1288
        %1398 = vmatprep.subr.mxu0 0.0
        %1399 = vmatpush1.msra.mxu0 %v1287
        %1400 = vmatprep.subr.mxu0 0.0
        %1401 = vmatpush1.msra.mxu0 %v1286
        %1402 = vmatprep.subr.mxu0 0.0
        %1403 = vmatpush1.msra.mxu0 %v1285
        %1404 = vmatprep.subr.mxu0 0.0
        %1405 = vmatpush1.msra.mxu0 %v1284
        %1406 = vmatprep.subr.mxu0 0.0
        %1407 = vmatpush1.msra.mxu0 %v1283
        %1408 = vmatprep.subr.mxu0 0.0
        %1409 = vmatpush1.msra.mxu0 %v1282
        %1410 = vmatprep.subr.mxu0 0.0
        %1411 = vmatpush1.msra.mxu0 %v1281
        %1412 = vmatprep.subr.mxu0 0.0
        %1413 = vmatpush1.msra.mxu0 %v1280
        %1414 = vmatprep.subr.mxu0 0.0
        %1415 = vmatpush2.msra.mxu0 0.0
        %1416 = vmatprep.subr.mxu0 0.0
        %1417 = vmatpush2.msra.mxu0 0.0
        %1418 = vmatprep.subr.mxu0 0.0
        %1419 = vmatpush2.msra.mxu0 0.0
        %1420 = vmatprep.subr.mxu0 0.0
        %1421 = vmatpush2.msra.mxu0 0.0
        %1422 = vmatprep.subr.mxu0 0.0
        %1423 = vmatpush2.msra.mxu0 0.0
        %1424 = vmatprep.subr.mxu0 0.0
        %1425 = vmatpush2.msra.mxu0 0.0
        %1426 = vmatprep.subr.mxu0 0.0
        %1427 = vmatpush2.msra.mxu0 0.0
        %1428 = vmatprep.subr.mxu0 0.0
        %1429 = vmatpush2.msra.mxu0 0.0
        %1430 = vmatprep.subr.mxu0 0.0
        %1431 = vmatpush2.msra.mxu0 0.0
        %1432 = vmatprep.subr.mxu0 0.0
        %1433 = vmatpush2.msra.mxu0 0.0
        %1434 = vmatprep.subr.mxu0 0.0
        %1435 = vmatpush2.msra.mxu0 0.0
        %1436 = vmatprep.subr.mxu0 0.0
        %1437 = vmatpush2.msra.mxu0 0.0
        %1438 = vmatprep.subr.mxu0 0.0
        %1439 = vmatpush2.msra.mxu0 0.0
        %1440 = vmatprep.subr.mxu0 0.0
        %1441 = vmatpush2.msra.mxu0 0.0
        %1442 = vmatprep.subr.mxu0 0.0
        %1443 = vmatpush2.msra.mxu0 0.0
        %1444 = vmatprep.subr.mxu0 0.0
        %1445 = vmatpush2.msra.mxu0 0.0
        %1446 = vmatprep.mubr.f32.mxu0 0.0
        %1447 = vmatmul.mubr.f32.gmra.mxu0 %v896
        %v1448 = vpop.f32.mrf.mxu0
        %v1449 = vadd.f32 %v1379, %v1448
        %v1450 = vpop.f32.mrf.mxu0
        %1451 = vdwg.mxu0
        %v1452 = vld [vmem:[%s7] sm:$0x1]
        %v1453 = vadd.f32 %v1449, %v1452
        %1454 = vst [vmem:[%s449] sm:$0x1] %v1453
        %1455 = vst.msk [vmem:[%s455] sm:$0x1] %vm1194, %v1205
        %s1456 = sand.u32 %s301, 1
        %s1457 = scalar_lea.sflag [#allocation3], %s1456
        %s1458 = sand.u32 %s301, 1
        %s1459 = scalar_lea.vmem [#allocation2], %s1458
        %s1460 = sand.u32 %s327, 1
        %s1461 = scalar_lea.sflag [#allocation5], %s1460
        %s1462 = sand.u32 %s327, 1
        %s1463 = scalar_lea.vmem [#allocation4], %s1462
        // Predicated region
        $region69: #{dstfnet_forward.1} parent=67 // pred_check
          %p1464 = pneg %p311
        $region70: #{dstfnet_forward.1} parent=67 // pred_check_branch
          %1466 = sbr.rel (%p1464) target = $region72
        $region71: #{dstfnet_forward.1} parent=67 // pred_region
          %s1468 = ssub.s32 16, 16
          %1469 = vsyncadd %s1457, %s1468
          %s1470 = smul.addr %s31, 16
          %s1471 = scalar_lea.hbm %s12, %s1470
          %s1473 = sshll.u32 %s1459, 4
          %s1474 = int_to_ptr.vmem [resolvable:$true] %s1473
          %1476 = dma.vmem_to_hbm [thread:$0]  %s1474, 16, %s1471, %s1457
        $region72: #{dstfnet_forward.1} parent=67 // pred_fallthru
          _
        // Predicated region
        $region73: #{dstfnet_forward.1} parent=67 // pred_check
          %p1477 = pneg %p337
        $region74: #{dstfnet_forward.1} parent=67 // pred_check_branch
          %1479 = sbr.rel (%p1477) target = $region76
        $region75: #{dstfnet_forward.1} parent=67 // pred_region
          %s1481 = ssub.s32 16, 16
          %1482 = vsyncadd %s1461, %s1481
          %s1483 = smul.addr %s31, 16
          %s1484 = scalar_lea.hbm %s13, %s1483
          %s1486 = sshll.u32 %s1463, 4
          %s1487 = int_to_ptr.vmem [resolvable:$true] %s1486
          %1489 = dma.vmem_to_hbm [thread:$0]  %s1487, 16, %s1484, %s1461
        $region76: #{dstfnet_forward.1} parent=67 // pred_fallthru
          _
      $region68: #{dstfnet_forward.1} parent=5 // pred_fallthru
        _
      %p1490 = scmp.le.s32.totalorder 2, %s26
      // Predicated region
      $region77: #{dstfnet_forward.1} parent=5 // pred_check
        %p1491 = pneg %p1490
      $region78: #{dstfnet_forward.1} parent=5 // pred_check_branch
        %1493 = sbr.rel (%p1491) target = $region80
      $region79: #{dstfnet_forward.1} parent=5 // pred_region
        %s1494 = ssub.s32 %s26, 2
        // Predicated region
        $region81: #{dstfnet_forward.1} parent=79 // pred_check
          %p1495 = pneg %p317
        $region82: #{dstfnet_forward.1} parent=79 // pred_check_branch
          %1497 = sbr.rel (%p1495) target = $region84
        $region83: #{dstfnet_forward.1} parent=79 // pred_region
          %s1498 = sand.u32 %s302, 1
          %s1499 = scalar_lea.sflag [#allocation3], %s1498
          %s1500 = sand.u32 %s302, 1
          %s1501 = scalar_lea.vmem [#allocation2], %s1500
          %1502 = dma.done %s1499, 16
        $region84: #{dstfnet_forward.1} parent=79 // pred_fallthru
          _
        // Predicated region
        $region85: #{dstfnet_forward.1} parent=79 // pred_check
          %p1503 = pneg %p343
        $region86: #{dstfnet_forward.1} parent=79 // pred_check_branch
          %1505 = sbr.rel (%p1503) target = $region88
        $region87: #{dstfnet_forward.1} parent=79 // pred_region
          %s1506 = sand.u32 %s328, 1
          %s1507 = scalar_lea.sflag [#allocation5], %s1506
          %s1508 = sand.u32 %s328, 1
          %s1509 = scalar_lea.vmem [#allocation4], %s1508
          %1510 = dma.done %s1507, 16
        $region88: #{dstfnet_forward.1} parent=79 // pred_fallthru
          _
      $region80: #{dstfnet_forward.1} parent=5 // pred_fallthru
        _
    $region6: #{dstfnet_forward.1} parent=1 // loop_footer
      %s30 = sadd.s32 1, %s26
    $region7: #{dstfnet_forward.1} parent=1 // loop_footer_branch
      %25 = sbr.rel target = $region3
    $region8: #{dstfnet_forward.1} parent=1 // loop_exit
      _
    %1511 = vsyncpa [#allocation3], 1
    %s1512 = scalar_lea.sflag [#allocation3], 1
    %1513 = vsyncpa %s1512, 1
    %1514 = vsyncpa [#allocation5], 1
    %s1515 = scalar_lea.sflag [#allocation5], 1
    %1516 = vsyncpa %s1515, 1

</llo_original>
